<compile_context>
chip_gen: v7x
topology: tpu7x:2x2x1
jax: 0.10.0
libtpu: 0.0.40
codegen_flags: <defaults>
</compile_context>

<pallas_src>
import functools

import jax
import jax.numpy as jnp
from jax.experimental import pallas as pl
from jax.experimental.pallas import tpu as pltpu

INPUT_SIZE = 8
HIDDEN = 32
SIMILAR_WEIGHT = 1.0
REGULARIZER = 0.1

_MAX_TILE = 512  # multiple of both 8 (sublane) and 128 (lane)


# ----------------------------------------------------------------------------
# small shape helpers
# ----------------------------------------------------------------------------
def _round_up(n, m):
    return ((n + m - 1) // m) * m


def _row_tiling(n, max_tile=_MAX_TILE):
    """Return (padded_size, tile).  tile == padded (single step) or a multiple
    of 128/8 so it is legal both as a sublane-row tile and a lane tile."""
    padded = _round_up(max(n, 1), 8)
    if padded <= max_tile:
        return padded, padded
    padded = _round_up(n, max_tile)
    return padded, max_tile


def _pad_rows(a, rows):
    pad = rows - a.shape[0]
    if pad == 0:
        return a
    return jnp.pad(a, ((0, pad), (0, 0)))


# ----------------------------------------------------------------------------
# Pallas kernels
# ----------------------------------------------------------------------------
def _node_conv_kernel(agg_ref, xs_ref, ea_ref, wx_ref, we_ref, b_ref,
                      out_ref, acc_ref, *, use_x):
    """Fused: msg = relu(x_src @ Wx + e @ We + b); out += agg @ msg."""
    k = pl.program_id(1)

    @pl.when(k == 0)
    def _():
        acc_ref[...] = jnp.zeros_like(acc_ref)

    msg = jnp.dot(ea_ref[...], we_ref[...], preferred_element_type=jnp.float32)
    if use_x:
        msg = msg + jnp.dot(xs_ref[...], wx_ref[...],
                            preferred_element_type=jnp.float32)
    msg = jnp.maximum(msg + b_ref[...], 0.0)                      # (tE, H)

    acc_ref[...] += jnp.dot(agg_ref[...], msg,
                            preferred_element_type=jnp.float32)   # (tN, H)

    @pl.when(k == pl.num_programs(1) - 1)
    def _():
        out_ref[...] = acc_ref[...]


def pallas_node_conv(agg, xsrc, eattr, w, b, *, n_pad, tn, e_pad, te, use_x):
    fx = xsrc.shape[1]
    fe = eattr.shape[1]
    h = w.shape[1]
    wx = w[:fx]
    we = w[fx:fx + fe]
    return pl.pallas_call(
        functools.partial(_node_conv_kernel, use_x=use_x),
        out_shape=jax.ShapeDtypeStruct((n_pad, h), jnp.float32),
        grid=(n_pad // tn, e_pad // te),
        in_specs=[
            pl.BlockSpec((tn, te), lambda i, k: (i, k)),   # aggregation matrix
            pl.BlockSpec((te, fx), lambda i, k: (k, 0)),   # x[src]
            pl.BlockSpec((te, fe), lambda i, k: (k, 0)),   # edge_attr
            pl.BlockSpec((fx, h), lambda i, k: (0, 0)),
            pl.BlockSpec((fe, h), lambda i, k: (0, 0)),
            pl.BlockSpec((1, h), lambda i, k: (0, 0)),
        ],
        out_specs=pl.BlockSpec((tn, h), lambda i, k: (i, 0)),
        scratch_shapes=[pltpu.VMEM((tn, h), jnp.float32)],
        compiler_params=pltpu.CompilerParams(
            dimension_semantics=("parallel", "arbitrary")),
    )(agg, xsrc, eattr, wx, we, b.reshape(1, h))


def _edge_conv_kernel(xs_ref, xd_ref, ea_ref, w1_ref, w2_ref, w3_ref, b_ref,
                      out_ref):
    """out = relu(x_src @ W1 + x_dst @ W2 + e @ W3 + b) (no HBM concat)."""
    y = jnp.dot(xs_ref[...], w1_ref[...], preferred_element_type=jnp.float32)
    y = y + jnp.dot(xd_ref[...], w2_ref[...], preferred_element_type=jnp.float32)
    y = y + jnp.dot(ea_ref[...], w3_ref[...], preferred_element_type=jnp.float32)
    out_ref[...] = jnp.maximum(y + b_ref[...], 0.0)


def pallas_edge_conv(xs, xd, ea, w, b, *, e_pad, te):
    fn = xs.shape[1]
    fe = ea.shape[1]
    h = w.shape[1]
    w1, w2, w3 = w[:fn], w[fn:2 * fn], w[2 * fn:2 * fn + fe]
    return pl.pallas_call(
        _edge_conv_kernel,
        out_shape=jax.ShapeDtypeStruct((e_pad, h), jnp.float32),
        grid=(e_pad // te,),
        in_specs=[
            pl.BlockSpec((te, fn), lambda i: (i, 0)),
            pl.BlockSpec((te, fn), lambda i: (i, 0)),
            pl.BlockSpec((te, fe), lambda i: (i, 0)),
            pl.BlockSpec((fn, h), lambda i: (0, 0)),
            pl.BlockSpec((fn, h), lambda i: (0, 0)),
            pl.BlockSpec((fe, h), lambda i: (0, 0)),
            pl.BlockSpec((1, h), lambda i: (0, 0)),
        ],
        out_specs=pl.BlockSpec((te, h), lambda i: (i, 0)),
        compiler_params=pltpu.CompilerParams(dimension_semantics=("parallel",)),
    )(xs, xd, ea, w1, w2, w3, b.reshape(1, h))


def _edge_head_kernel(xsT_ref, xdT_ref, eaT_ref, w1t_ref, w2t_ref, w3t_ref,
                      bT_ref, wct_ref, bc_ref, y_ref,
                      pred_ref, loss_ref,
                      s_p, s_p2, s_p3, s_p4, s_bce,
                      *, n_valid, similar_weight, regularizer):
    """Fused convE2 + classifier + sigmoid + weighted BCE + 4th-moment reg.

    Works in transposed (feature, edge) layout so the prediction write and the
    classifier matmul are lane-dense.  Loss moments are accumulated across the
    grid in (1,1) VMEM scratches (raw moments -> central 4th moment)."""
    li = pl.program_id(0)

    @pl.when(li == 0)
    def _():
        s_p[...] = jnp.zeros_like(s_p)
        s_p2[...] = jnp.zeros_like(s_p2)
        s_p3[...] = jnp.zeros_like(s_p3)
        s_p4[...] = jnp.zeros_like(s_p4)
        s_bce[...] = jnp.zeros_like(s_bce)

    hT = jnp.dot(w1t_ref[...], xsT_ref[...], preferred_element_type=jnp.float32)
    hT = hT + jnp.dot(w2t_ref[...], xdT_ref[...], preferred_element_type=jnp.float32)
    hT = hT + jnp.dot(w3t_ref[...], eaT_ref[...], preferred_element_type=jnp.float32)
    hT = jnp.maximum(hT + bT_ref[...], 0.0)                        # (H, tL)

    logits = jnp.dot(wct_ref[...], hT, preferred_element_type=jnp.float32)
    logits = logits + bc_ref[...]                                  # (1, tL)
    p = jax.nn.sigmoid(logits)                                     # (1, tL)

    col = li * p.shape[1] + jax.lax.broadcasted_iota(jnp.int32, p.shape, 1)
    mask = col < n_valid
    pm = jnp.where(mask, p, 0.0)

    pred_ref[...] = pm                                             # lane-dense store

    pm2 = pm * pm
    s_p[...] += jnp.sum(pm, axis=1, keepdims=True)
    s_p2[...] += jnp.sum(pm2, axis=1, keepdims=True)
    s_p3[...] += jnp.sum(pm2 * pm, axis=1, keepdims=True)
    s_p4[...] += jnp.sum(pm2 * pm2, axis=1, keepdims=True)

    # weighted BCE, PyTorch semantics: weight keys off prediction > 0.5,
    # log terms clamped at -100.
    y = y_ref[...]
    w = jnp.where(p > 0.5, jnp.float32(similar_weight), jnp.float32(1.0))
    log_p = jnp.maximum(jnp.log(p), -100.0)
    log_1mp = jnp.maximum(jnp.log(1.0 - p), -100.0)
    bce = w * -(y * log_p + (1.0 - y) * log_1mp)
    s_bce[...] += jnp.sum(jnp.where(mask, bce, 0.0), axis=1, keepdims=True)

    @pl.when(li == pl.num_programs(0) - 1)
    def _():
        n = jnp.float32(n_valid)
        mu = s_p[...] / n
        mu2 = mu * mu
        # central 4th moment from raw moments (single pass over tiles)
        m4 = (s_p4[...] / n - 4.0 * mu * (s_p3[...] / n)
              + 6.0 * mu2 * (s_p2[...] / n) - 3.0 * mu2 * mu2)
        m4 = jnp.maximum(m4, 0.0)
        loss_reg = -jnp.sqrt(jnp.sqrt(m4))        # -(m4 ** 0.25)
        loss_ref[...] = s_bce[...] / n + loss_reg * regularizer


def pallas_edge_head(xsT, xdT, eaT, y_row, conv_params, cls_params, *,
                     n_valid, l_pad, tl, similar_weight, regularizer):
    h = xsT.shape[0]
    w = conv_params["w"]
    w1t, w2t, w3t = w[:h].T, w[h:2 * h].T, w[2 * h:3 * h].T
    bT = conv_params["b"].reshape(h, 1)
    wct = cls_params["w"].reshape(h, 1).T          # (1, H)
    bc = cls_params["b"].reshape(1, 1)
    pred, loss = pl.pallas_call(
        functools.partial(_edge_head_kernel, n_valid=n_valid,
                          similar_weight=float(similar_weight),
                          regularizer=float(regularizer)),
        out_shape=(jax.ShapeDtypeStruct((1, l_pad), jnp.float32),
                   jax.ShapeDtypeStruct((1, 1), jnp.float32)),
        grid=(l_pad // tl,),
        in_specs=[
            pl.BlockSpec((h, tl), lambda i: (0, i)),   # X2[lsrc]^T
            pl.BlockSpec((h, tl), lambda i: (0, i)),   # X2[ldst]^T
            pl.BlockSpec((h, tl), lambda i: (0, i)),   # gathered edge_attr^T
            pl.BlockSpec((h, h), lambda i: (0, 0)),
            pl.BlockSpec((h, h), lambda i: (0, 0)),
            pl.BlockSpec((h, h), lambda i: (0, 0)),
            pl.BlockSpec((h, 1), lambda i: (0, 0)),
            pl.BlockSpec((1, h), lambda i: (0, 0)),
            pl.BlockSpec((1, 1), lambda i: (0, 0)),
            pl.BlockSpec((1, tl), lambda i: (0, i)),   # labels
        ],
        out_specs=(pl.BlockSpec((1, tl), lambda i: (0, i)),
                   pl.BlockSpec((1, 1), lambda i: (0, 0))),
        scratch_shapes=[pltpu.VMEM((1, 1), jnp.float32) for _ in range(5)],
        compiler_params=pltpu.CompilerParams(dimension_semantics=("arbitrary",)),
    )(xsT, xdT, eaT, w1t, w2t, w3t, bT, wct, bc, y_row)
    return pred, loss


# ----------------------------------------------------------------------------
# JAX-side glue (gathers / sparse coalesce) — data-dependent, stays outside
# ----------------------------------------------------------------------------
def build_mean_agg(dst, num_nodes, n_pad, e_pad):
    """(n_pad, e_pad) mean-aggregation operator, built ONCE and reused.
    TODO(synk): O(N*E) dense; replace with a sorted segment-sum kernel
    (scalar-prefetched dst offsets) for very large graphs."""
    e = dst.shape[0]
    dst_p = jnp.full((e_pad,), -1, dst.dtype).at[:e].set(dst)
    onehot = (dst_p[None, :] ==
              jnp.arange(n_pad, dtype=dst.dtype)[:, None]).astype(jnp.float32)
    deg = jnp.sum(onehot, axis=1, keepdims=True)
    return onehot / jnp.maximum(deg, 1.0)


def sparse_gather_edge_attr(edge_index, edge_attr, edge_label_index, num_nodes):
    """Emulates torch.sparse_coo_tensor(edge_index, edge_attr, (N,N)) indexed at
    edge_label_index: duplicates are summed (coalesce), missing pairs -> 0.
    O(E log E) via sort + searchsorted + cumsum; no dense (N,N,H) tensor.
    TODO(synk): int32 pair keys overflow for N > ~46k; use 64-bit keys there."""
    key = edge_index[0].astype(jnp.int32) * num_nodes + edge_index[1].astype(jnp.int32)
    qkey = (edge_label_index[0].astype(jnp.int32) * num_nodes
            + edge_label_index[1].astype(jnp.int32))
    order = jnp.argsort(key)
    skey = key[order]
    sattr = edge_attr[order]
    csum = jnp.concatenate(
        [jnp.zeros((1, edge_attr.shape[1]), edge_attr.dtype),
         jnp.cumsum(sattr, axis=0)], axis=0)
    lo = jnp.searchsorted(skey, qkey, side="left")
    hi = jnp.searchsorted(skey, qkey, side="right")
    return csum[hi] - csum[lo]


# ----------------------------------------------------------------------------
# Forward pass
# ----------------------------------------------------------------------------
def gcn_edge_based_forward(params, x, edge_index, edge_attr,
                           edge_label_index, edge_type,
                           similar_weight=SIMILAR_WEIGHT,
                           regularizer=REGULARIZER):
    x = x.astype(jnp.float32)
    n_nodes, f_in = x.shape
    n_edges = edge_index.shape[1]
    n_labels = edge_label_index.shape[1]

    if edge_attr is None or edge_attr.shape[0] == 0:
        edge_attr = x[edge_index[1]] - x[edge_index[0]]
    edge_attr = edge_attr.astype(jnp.float32)

    src, dst = edge_index[0], edge_index[1]
    lsrc, ldst = edge_label_index[0], edge_label_index[1]

    n_pad, tn = _row_tiling(n_nodes)
    e_pad, te = _row_tiling(n_edges)
    l_pad, tl = _row_tiling(n_labels)

    agg = build_mean_agg(dst, n_nodes, n_pad, e_pad)       # built once, reused

    ea0 = _pad_rows(edge_attr, e_pad)                      # (e_pad, F)
    zeros_src = jnp.zeros((e_pad, f_in), jnp.float32)      # X = zeros_like(X)

    # convN1 (x_src is all-zero -> its matmul is skipped inside the kernel)
    X1 = pallas_node_conv(agg, zeros_src, ea0,
                          params["convN1"]["w"], params["convN1"]["b"],
                          n_pad=n_pad, tn=tn, e_pad=e_pad, te=te,
                          use_x=False)[:n_nodes]
    # dropout1 (p=0.0) -> identity

    xs1 = _pad_rows(X1[src], e_pad)
    xd1 = _pad_rows(X1[dst], e_pad)

    # convE1 (fused split-weight linear)
    EA1p = pallas_edge_conv(xs1, xd1, ea0,
                            params["convE1"]["w"], params["convE1"]["b"],
                            e_pad=e_pad, te=te)
    EA1 = EA1p[:n_edges]

    # convN2 (padded edge rows of EA1p are killed by the zero agg columns)
    X2 = pallas_node_conv(agg, xs1, EA1p,
                          params["convN2"]["w"], params["convN2"]["b"],
                          n_pad=n_pad, tn=tn, e_pad=e_pad, te=te,
                          use_x=True)[:n_nodes]
    # dropout2 (p=0.0) -> identity

    # sparse_coo_tensor(edge_index, EA1, (N,N))[lsrc, ldst] (coalesced, 0 if absent)
    epred_attr = sparse_gather_edge_attr(edge_index, EA1, edge_label_index,
                                         n_nodes)          # (EL, 32)

    # fused head: convE2 + classifier + sigmoid + loss (transposed layout)
    xsT = _pad_rows(X2[lsrc], l_pad).T
    xdT = _pad_rows(X2[ldst], l_pad).T
    eaT = _pad_rows(epred_attr, l_pad).T
    y_row = jnp.zeros((1, l_pad), jnp.float32).at[0, :n_labels].set(
        edge_type.astype(jnp.float32))

    pred_row, loss = pallas_edge_head(
        xsT, xdT, eaT, y_row, params["convE2"], params["cls"],
        n_valid=n_labels, l_pad=l_pad, tl=tl,
        similar_weight=similar_weight, regularizer=regularizer)

    edge_pred = pred_row[0, :n_labels]
    return edge_pred, loss[0, 0]


# ----------------------------------------------------------------------------
# Deterministic parameter init (nn.Linear-style uniform)
# ----------------------------------------------------------------------------
def init_linear(key, fan_in, fan_out):
    k1, k2 = jax.random.split(key)
    bound = 1.0 / float(fan_in) ** 0.5
    w = jax.random.uniform(k1, (fan_in, fan_out), jnp.float32, -bound, bound)
    b = jax.random.uniform(k2, (fan_out,), jnp.float32, -bound, bound)
    return {"w": w, "b": b}


if __name__ == "__main__":
    key = jax.random.PRNGKey(0)
    kx, ke, kt, kp = jax.random.split(key, 4)

    N, E, EL = 16, 64, 32
    x = jax.random.normal(kx, (N, INPUT_SIZE), jnp.float32)
    edge_index = jax.random.randint(ke, (2, E), 0, N, dtype=jnp.int32)
    edge_label_index = edge_index[:, :EL]
    edge_type = jax.random.bernoulli(kt, 0.5, (EL,)).astype(jnp.float32)

    keys = jax.random.split(kp, 5)
    params = {
        "convN1": init_linear(keys[0], INPUT_SIZE + INPUT_SIZE, HIDDEN),
        "convE1": init_linear(keys[1], HIDDEN + HIDDEN + INPUT_SIZE, HIDDEN),
        "convN2": init_linear(keys[2], HIDDEN + HIDDEN, HIDDEN),
        "convE2": init_linear(keys[3], HIDDEN + HIDDEN + HIDDEN, HIDDEN),
        "cls": init_linear(keys[4], HIDDEN, 1),
    }

    fwd = jax.jit(gcn_edge_based_forward)
    edge_pred, loss = fwd(params, x, edge_index, None, edge_label_index, edge_type)
    jax.block_until_ready((edge_pred, loss))

    assert edge_pred.shape == (EL,)
    assert loss.shape == ()
    assert bool(jnp.all(jnp.isfinite(edge_pred))) and bool(jnp.isfinite(loss))
    print("KERNEL_OK")
</pallas_src>

<mosaic_0001>
module attributes {stable_mosaic.version = 11 : i64} {
  func.func @_node_conv_kernel(%arg0: i32, %arg1: i32, %arg2: memref<16x64xf32, #tpu.memory_space<vmem>>, %arg3: memref<64x8xf32, #tpu.memory_space<vmem>>, %arg4: memref<64x8xf32, #tpu.memory_space<vmem>>, %arg5: memref<8x32xf32, #tpu.memory_space<vmem>>, %arg6: memref<8x32xf32, #tpu.memory_space<vmem>>, %arg7: memref<1x32xf32, #tpu.memory_space<vmem>>, %arg8: memref<16x32xf32, #tpu.memory_space<vmem>>, %arg9: memref<16x32xf32, #tpu.memory_space<vmem>>) attributes {dimension_semantics = [#tpu.dimension_semantics<parallel>, #tpu.dimension_semantics<arbitrary>], iteration_bounds = array<i64: 1, 1>, scalar_prefetch = 0 : i64, scratch_operands = 1 : i64, tpu.core_type = #tpu.core_type<tc>, window_params = [{transform_indices = @transform_0, window_bounds = array<i64: 16, 64>}, {transform_indices = @transform_1, window_bounds = array<i64: 64, 8>}, {transform_indices = @transform_2, window_bounds = array<i64: 64, 8>}, {pipeline_mode = #tpu.pipeline_mode<synchronous>, transform_indices = @transform_3, window_bounds = array<i64: 8, 32>}, {pipeline_mode = #tpu.pipeline_mode<synchronous>, transform_indices = @transform_4, window_bounds = array<i64: 8, 32>}, {pipeline_mode = #tpu.pipeline_mode<synchronous>, transform_indices = @transform_5, window_bounds = array<i64: 1, 32>}, {transform_indices = @transform_6, window_bounds = array<i64: 16, 32>}]} {
    %c0_i32 = arith.constant 0 : i32
    %0 = arith.cmpi eq, %arg1, %c0_i32 : i32
    %1 = arith.extui %0 : i1 to i32
    %c0_i32_0 = arith.constant 0 : i32
    %2 = arith.cmpi ne, %1, %c0_i32_0 : i32
    scf.if %2 {
      %cst_16 = arith.constant 0.000000e+00 : f32
      %19 = vector.broadcast %cst_16 : f32 to vector<16x32xf32>
      %c0_17 = arith.constant 0 : index
      %c0_18 = arith.constant 0 : index
      %20 = vector.load %arg9[%c0_17, %c0_18] : memref<16x32xf32, #tpu.memory_space<vmem>>, vector<16x32xf32>
      tpu.vector_store %arg9[%c0_17, %c0_18], %19 {strides = array<i32>} : memref<16x32xf32, #tpu.memory_space<vmem>>, vector<16x32xf32>,
    } else {
    }
    %c0 = arith.constant 0 : index
    %c0_1 = arith.constant 0 : index
    %3 = vector.load %arg4[%c0, %c0_1] : memref<64x8xf32, #tpu.memory_space<vmem>>, vector<64x8xf32>
    %c0_2 = arith.constant 0 : index
    %c0_3 = arith.constant 0 : index
    %4 = vector.load %arg6[%c0_2, %c0_3] : memref<8x32xf32, #tpu.memory_space<vmem>>, vector<8x32xf32>
    %cst = arith.constant dense<0.000000e+00> : vector<64x32xf32>
    %5 = tpu.matmul %3, %4, %cst {dimension_numbers = #tpu.dot_dimension_numbers<[1], [0], [0], [1], [0, 0, 1, 1], [], []>} : vector<64x8xf32>, vector<8x32xf32>, vector<64x32xf32> -> vector<64x32xf32>
    %c0_4 = arith.constant 0 : index
    %c0_5 = arith.constant 0 : index
    %6 = vector.load %arg7[%c0_4, %c0_5] : memref<1x32xf32, #tpu.memory_space<vmem>>, vector<1x32xf32>
    %7 = vector.broadcast %6 : vector<1x32xf32> to vector<64x32xf32>
    %8 = arith.addf %5, %7 : vector<64x32xf32>
    %cst_6 = arith.constant 0.000000e+00 : f32
    %9 = vector.broadcast %cst_6 : f32 to vector<64x32xf32>
    %10 = arith.maximumf %8, %9 : vector<64x32xf32>
    %c0_7 = arith.constant 0 : index
    %c0_8 = arith.constant 0 : index
    %11 = vector.load %arg9[%c0_7, %c0_8] : memref<16x32xf32, #tpu.memory_space<vmem>>, vector<16x32xf32>
    %c0_9 = arith.constant 0 : index
    %c0_10 = arith.constant 0 : index
    %12 = vector.load %arg2[%c0_9, %c0_10] : memref<16x64xf32, #tpu.memory_space<vmem>>, vector<16x64xf32>
    %cst_11 = arith.constant dense<0.000000e+00> : vector<16x32xf32>
    %13 = tpu.matmul %12, %10, %cst_11 {dimension_numbers = #tpu.dot_dimension_numbers<[1], [0], [0], [1], [0, 0, 1, 1], [], []>} : vector<16x64xf32>, vector<64x32xf32>, vector<16x32xf32> -> vector<16x32xf32>
    %14 = arith.addf %11, %13 : vector<16x32xf32>
    %c0_12 = arith.constant 0 : index
    %c0_13 = arith.constant 0 : index
    %15 = vector.load %arg9[%c0_12, %c0_13] : memref<16x32xf32, #tpu.memory_space<vmem>>, vector<16x32xf32>
    tpu.vector_store %arg9[%c0_12, %c0_13], %14 {strides = array<i32>} : memref<16x32xf32, #tpu.memory_space<vmem>>, vector<16x32xf32>,
    %c0_i32_14 = arith.constant 0 : i32
    %16 = arith.cmpi eq, %arg1, %c0_i32_14 : i32
    %17 = arith.extui %16 : i1 to i32
    %c0_i32_15 = arith.constant 0 : i32
    %18 = arith.cmpi ne, %17, %c0_i32_15 : i32
    scf.if %18 {
      %c0_16 = arith.constant 0 : index
      %c0_17 = arith.constant 0 : index
      %19 = vector.load %arg9[%c0_16, %c0_17] : memref<16x32xf32, #tpu.memory_space<vmem>>, vector<16x32xf32>
      %c0_18 = arith.constant 0 : index
      %c0_19 = arith.constant 0 : index
      %20 = vector.load %arg8[%c0_18, %c0_19] : memref<16x32xf32, #tpu.memory_space<vmem>>, vector<16x32xf32>
      tpu.vector_store %arg8[%c0_18, %c0_19], %19 {strides = array<i32>} : memref<16x32xf32, #tpu.memory_space<vmem>>, vector<16x32xf32>,
    } else {
    }
    return
  }
  func.func @transform_0(%arg0: i32, %arg1: i32) -> (i32, i32) {
    %c0_i32 = arith.constant 0 : i32
    return %arg0, %arg1 : i32, i32
  }
  func.func @transform_1(%arg0: i32, %arg1: i32) -> (i32, i32) {
    %c0_i32 = arith.constant 0 : i32
    %c0_i32_0 = arith.constant 0 : i32
    return %arg1, %c0_i32 : i32, i32
  }
  func.func @transform_2(%arg0: i32, %arg1: i32) -> (i32, i32) {
    %c0_i32 = arith.constant 0 : i32
    %c0_i32_0 = arith.constant 0 : i32
    return %arg1, %c0_i32 : i32, i32
  }
  func.func @transform_3(%arg0: i32, %arg1: i32) -> (i32, i32) {
    %c0_i32 = arith.constant 0 : i32
    %c0_i32_0 = arith.constant 0 : i32
    %c0_i32_1 = arith.constant 0 : i32
    return %c0_i32, %c0_i32_0 : i32, i32
  }
  func.func @transform_4(%arg0: i32, %arg1: i32) -> (i32, i32) {
    %c0_i32 = arith.constant 0 : i32
    %c0_i32_0 = arith.constant 0 : i32
    %c0_i32_1 = arith.constant 0 : i32
    return %c0_i32, %c0_i32_0 : i32, i32
  }
  func.func @transform_5(%arg0: i32, %arg1: i32) -> (i32, i32) {
    %c0_i32 = arith.constant 0 : i32
    %c0_i32_0 = arith.constant 0 : i32
    %c0_i32_1 = arith.constant 0 : i32
    return %c0_i32, %c0_i32_0 : i32, i32
  }
  func.func @transform_6(%arg0: i32, %arg1: i32) -> (i32, i32) {
    %c0_i32 = arith.constant 0 : i32
    %c0_i32_0 = arith.constant 0 : i32
    return %arg0, %c0_i32 : i32, i32
  }
}

module attributes {stable_mosaic.version = 11 : i64} {
  func.func @_edge_conv_kernel(%arg0: i32, %arg1: memref<64x32xf32, #tpu.memory_space<vmem>>, %arg2: memref<64x32xf32, #tpu.memory_space<vmem>>, %arg3: memref<64x8xf32, #tpu.memory_space<vmem>>, %arg4: memref<32x32xf32, #tpu.memory_space<vmem>>, %arg5: memref<32x32xf32, #tpu.memory_space<vmem>>, %arg6: memref<8x32xf32, #tpu.memory_space<vmem>>, %arg7: memref<1x32xf32, #tpu.memory_space<vmem>>, %arg8: memref<64x32xf32, #tpu.memory_space<vmem>>) attributes {dimension_semantics = [#tpu.dimension_semantics<parallel>], iteration_bounds = array<i64: 1>, scalar_prefetch = 0 : i64, scratch_operands = 0 : i64, tpu.core_type = #tpu.core_type<tc>, window_params = [{transform_indices = @transform_0, window_bounds = array<i64: 64, 32>}, {transform_indices = @transform_1, window_bounds = array<i64: 64, 32>}, {transform_indices = @transform_2, window_bounds = array<i64: 64, 8>}, {pipeline_mode = #tpu.pipeline_mode<synchronous>, transform_indices = @transform_3, window_bounds = array<i64: 32, 32>}, {pipeline_mode = #tpu.pipeline_mode<synchronous>, transform_indices = @transform_4, window_bounds = array<i64: 32, 32>}, {pipeline_mode = #tpu.pipeline_mode<synchronous>, transform_indices = @transform_5, window_bounds = array<i64: 8, 32>}, {pipeline_mode = #tpu.pipeline_mode<synchronous>, transform_indices = @transform_6, window_bounds = array<i64: 1, 32>}, {transform_indices = @transform_7, window_bounds = array<i64: 64, 32>}]} {
    %c0 = arith.constant 0 : index
    %c0_0 = arith.constant 0 : index
    %0 = vector.load %arg1[%c0, %c0_0] : memref<64x32xf32, #tpu.memory_space<vmem>>, vector<64x32xf32>
    %c0_1 = arith.constant 0 : index
    %c0_2 = arith.constant 0 : index
    %1 = vector.load %arg4[%c0_1, %c0_2] : memref<32x32xf32, #tpu.memory_space<vmem>>, vector<32x32xf32>
    %cst = arith.constant dense<0.000000e+00> : vector<64x32xf32>
    %2 = tpu.matmul %0, %1, %cst {dimension_numbers = #tpu.dot_dimension_numbers<[1], [0], [0], [1], [0, 0, 1, 1], [], []>} : vector<64x32xf32>, vector<32x32xf32>, vector<64x32xf32> -> vector<64x32xf32>
    %c0_3 = arith.constant 0 : index
    %c0_4 = arith.constant 0 : index
    %3 = vector.load %arg2[%c0_3, %c0_4] : memref<64x32xf32, #tpu.memory_space<vmem>>, vector<64x32xf32>
    %c0_5 = arith.constant 0 : index
    %c0_6 = arith.constant 0 : index
    %4 = vector.load %arg5[%c0_5, %c0_6] : memref<32x32xf32, #tpu.memory_space<vmem>>, vector<32x32xf32>
    %cst_7 = arith.constant dense<0.000000e+00> : vector<64x32xf32>
    %5 = tpu.matmul %3, %4, %cst_7 {dimension_numbers = #tpu.dot_dimension_numbers<[1], [0], [0], [1], [0, 0, 1, 1], [], []>} : vector<64x32xf32>, vector<32x32xf32>, vector<64x32xf32> -> vector<64x32xf32>
    %6 = arith.addf %2, %5 : vector<64x32xf32>
    %c0_8 = arith.constant 0 : index
    %c0_9 = arith.constant 0 : index
    %7 = vector.load %arg3[%c0_8, %c0_9] : memref<64x8xf32, #tpu.memory_space<vmem>>, vector<64x8xf32>
    %c0_10 = arith.constant 0 : index
    %c0_11 = arith.constant 0 : index
    %8 = vector.load %arg6[%c0_10, %c0_11] : memref<8x32xf32, #tpu.memory_space<vmem>>, vector<8x32xf32>
    %cst_12 = arith.constant dense<0.000000e+00> : vector<64x32xf32>
    %9 = tpu.matmul %7, %8, %cst_12 {dimension_numbers = #tpu.dot_dimension_numbers<[1], [0], [0], [1], [0, 0, 1, 1], [], []>} : vector<64x8xf32>, vector<8x32xf32>, vector<64x32xf32> -> vector<64x32xf32>
    %10 = arith.addf %6, %9 : vector<64x32xf32>
    %c0_13 = arith.constant 0 : index
    %c0_14 = arith.constant 0 : index
    %11 = vector.load %arg7[%c0_13, %c0_14] : memref<1x32xf32, #tpu.memory_space<vmem>>, vector<1x32xf32>
    %12 = vector.broadcast %11 : vector<1x32xf32> to vector<64x32xf32>
    %13 = arith.addf %10, %12 : vector<64x32xf32>
    %cst_15 = arith.constant 0.000000e+00 : f32
    %14 = vector.broadcast %cst_15 : f32 to vector<64x32xf32>
    %15 = arith.maximumf %13, %14 : vector<64x32xf32>
    %c0_16 = arith.constant 0 : index
    %c0_17 = arith.constant 0 : index
    %16 = vector.load %arg8[%c0_16, %c0_17] : memref<64x32xf32, #tpu.memory_space<vmem>>, vector<64x32xf32>
    tpu.vector_store %arg8[%c0_16, %c0_17], %15 {strides = array<i32>} : memref<64x32xf32, #tpu.memory_space<vmem>>, vector<64x32xf32>,
    return
  }
  func.func @transform_0(%arg0: i32) -> (i32, i32) {
    %c0_i32 = arith.constant 0 : i32
    %c0_i32_0 = arith.constant 0 : i32
    return %arg0, %c0_i32 : i32, i32
  }
  func.func @transform_1(%arg0: i32) -> (i32, i32) {
    %c0_i32 = arith.constant 0 : i32
    %c0_i32_0 = arith.constant 0 : i32
    return %arg0, %c0_i32 : i32, i32
  }
  func.func @transform_2(%arg0: i32) -> (i32, i32) {
    %c0_i32 = arith.constant 0 : i32
    %c0_i32_0 = arith.constant 0 : i32
    return %arg0, %c0_i32 : i32, i32
  }
  func.func @transform_3(%arg0: i32) -> (i32, i32) {
    %c0_i32 = arith.constant 0 : i32
    %c0_i32_0 = arith.constant 0 : i32
    %c0_i32_1 = arith.constant 0 : i32
    return %c0_i32, %c0_i32_0 : i32, i32
  }
  func.func @transform_4(%arg0: i32) -> (i32, i32) {
    %c0_i32 = arith.constant 0 : i32
    %c0_i32_0 = arith.constant 0 : i32
    %c0_i32_1 = arith.constant 0 : i32
    return %c0_i32, %c0_i32_0 : i32, i32
  }
  func.func @transform_5(%arg0: i32) -> (i32, i32) {
    %c0_i32 = arith.constant 0 : i32
    %c0_i32_0 = arith.constant 0 : i32
    %c0_i32_1 = arith.constant 0 : i32
    return %c0_i32, %c0_i32_0 : i32, i32
  }
  func.func @transform_6(%arg0: i32) -> (i32, i32) {
    %c0_i32 = arith.constant 0 : i32
    %c0_i32_0 = arith.constant 0 : i32
    %c0_i32_1 = arith.constant 0 : i32
    return %c0_i32, %c0_i32_0 : i32, i32
  }
  func.func @transform_7(%arg0: i32) -> (i32, i32) {
    %c0_i32 = arith.constant 0 : i32
    %c0_i32_0 = arith.constant 0 : i32
    return %arg0, %c0_i32 : i32, i32
  }
}

module attributes {stable_mosaic.version = 11 : i64} {
  func.func @_node_conv_kernel(%arg0: i32, %arg1: i32, %arg2: memref<16x64xf32, #tpu.memory_space<vmem>>, %arg3: memref<64x32xf32, #tpu.memory_space<vmem>>, %arg4: memref<64x32xf32, #tpu.memory_space<vmem>>, %arg5: memref<32x32xf32, #tpu.memory_space<vmem>>, %arg6: memref<32x32xf32, #tpu.memory_space<vmem>>, %arg7: memref<1x32xf32, #tpu.memory_space<vmem>>, %arg8: memref<16x32xf32, #tpu.memory_space<vmem>>, %arg9: memref<16x32xf32, #tpu.memory_space<vmem>>) attributes {dimension_semantics = [#tpu.dimension_semantics<parallel>, #tpu.dimension_semantics<arbitrary>], iteration_bounds = array<i64: 1, 1>, scalar_prefetch = 0 : i64, scratch_operands = 1 : i64, tpu.core_type = #tpu.core_type<tc>, window_params = [{transform_indices = @transform_0, window_bounds = array<i64: 16, 64>}, {transform_indices = @transform_1, window_bounds = array<i64: 64, 32>}, {transform_indices = @transform_2, window_bounds = array<i64: 64, 32>}, {pipeline_mode = #tpu.pipeline_mode<synchronous>, transform_indices = @transform_3, window_bounds = array<i64: 32, 32>}, {pipeline_mode = #tpu.pipeline_mode<synchronous>, transform_indices = @transform_4, window_bounds = array<i64: 32, 32>}, {pipeline_mode = #tpu.pipeline_mode<synchronous>, transform_indices = @transform_5, window_bounds = array<i64: 1, 32>}, {transform_indices = @transform_6, window_bounds = array<i64: 16, 32>}]} {
    %c0_i32 = arith.constant 0 : i32
    %0 = arith.cmpi eq, %arg1, %c0_i32 : i32
    %1 = arith.extui %0 : i1 to i32
    %c0_i32_0 = arith.constant 0 : i32
    %2 = arith.cmpi ne, %1, %c0_i32_0 : i32
    scf.if %2 {
      %cst_21 = arith.constant 0.000000e+00 : f32
      %23 = vector.broadcast %cst_21 : f32 to vector<16x32xf32>
      %c0_22 = arith.constant 0 : index
      %c0_23 = arith.constant 0 : index
      %24 = vector.load %arg9[%c0_22, %c0_23] : memref<16x32xf32, #tpu.memory_space<vmem>>, vector<16x32xf32>
      tpu.vector_store %arg9[%c0_22, %c0_23], %23 {strides = array<i32>} : memref<16x32xf32, #tpu.memory_space<vmem>>, vector<16x32xf32>,
    } else {
    }
    %c0 = arith.constant 0 : index
    %c0_1 = arith.constant 0 : index
    %3 = vector.load %arg4[%c0, %c0_1] : memref<64x32xf32, #tpu.memory_space<vmem>>, vector<64x32xf32>
    %c0_2 = arith.constant 0 : index
    %c0_3 = arith.constant 0 : index
    %4 = vector.load %arg6[%c0_2, %c0_3] : memref<32x32xf32, #tpu.memory_space<vmem>>, vector<32x32xf32>
    %cst = arith.constant dense<0.000000e+00> : vector<64x32xf32>
    %5 = tpu.matmul %3, %4, %cst {dimension_numbers = #tpu.dot_dimension_numbers<[1], [0], [0], [1], [0, 0, 1, 1], [], []>} : vector<64x32xf32>, vector<32x32xf32>, vector<64x32xf32> -> vector<64x32xf32>
    %c0_4 = arith.constant 0 : index
    %c0_5 = arith.constant 0 : index
    %6 = vector.load %arg3[%c0_4, %c0_5] : memref<64x32xf32, #tpu.memory_space<vmem>>, vector<64x32xf32>
    %c0_6 = arith.constant 0 : index
    %c0_7 = arith.constant 0 : index
    %7 = vector.load %arg5[%c0_6, %c0_7] : memref<32x32xf32, #tpu.memory_space<vmem>>, vector<32x32xf32>
    %cst_8 = arith.constant dense<0.000000e+00> : vector<64x32xf32>
    %8 = tpu.matmul %6, %7, %cst_8 {dimension_numbers = #tpu.dot_dimension_numbers<[1], [0], [0], [1], [0, 0, 1, 1], [], []>} : vector<64x32xf32>, vector<32x32xf32>, vector<64x32xf32> -> vector<64x32xf32>
    %9 = arith.addf %5, %8 : vector<64x32xf32>
    %c0_9 = arith.constant 0 : index
    %c0_10 = arith.constant 0 : index
    %10 = vector.load %arg7[%c0_9, %c0_10] : memref<1x32xf32, #tpu.memory_space<vmem>>, vector<1x32xf32>
    %11 = vector.broadcast %10 : vector<1x32xf32> to vector<64x32xf32>
    %12 = arith.addf %9, %11 : vector<64x32xf32>
    %cst_11 = arith.constant 0.000000e+00 : f32
    %13 = vector.broadcast %cst_11 : f32 to vector<64x32xf32>
    %14 = arith.maximumf %12, %13 : vector<64x32xf32>
    %c0_12 = arith.constant 0 : index
    %c0_13 = arith.constant 0 : index
    %15 = vector.load %arg9[%c0_12, %c0_13] : memref<16x32xf32, #tpu.memory_space<vmem>>, vector<16x32xf32>
    %c0_14 = arith.constant 0 : index
    %c0_15 = arith.constant 0 : index
    %16 = vector.load %arg2[%c0_14, %c0_15] : memref<16x64xf32, #tpu.memory_space<vmem>>, vector<16x64xf32>
    %cst_16 = arith.constant dense<0.000000e+00> : vector<16x32xf32>
    %17 = tpu.matmul %16, %14, %cst_16 {dimension_numbers = #tpu.dot_dimension_numbers<[1], [0], [0], [1], [0, 0, 1, 1], [], []>} : vector<16x64xf32>, vector<64x32xf32>, vector<16x32xf32> -> vector<16x32xf32>
    %18 = arith.addf %15, %17 : vector<16x32xf32>
    %c0_17 = arith.constant 0 : index
    %c0_18 = arith.constant 0 : index
    %19 = vector.load %arg9[%c0_17, %c0_18] : memref<16x32xf32, #tpu.memory_space<vmem>>, vector<16x32xf32>
    tpu.vector_store %arg9[%c0_17, %c0_18], %18 {strides = array<i32>} : memref<16x32xf32, #tpu.memory_space<vmem>>, vector<16x32xf32>,
    %c0_i32_19 = arith.constant 0 : i32
    %20 = arith.cmpi eq, %arg1, %c0_i32_19 : i32
    %21 = arith.extui %20 : i1 to i32
    %c0_i32_20 = arith.constant 0 : i32
    %22 = arith.cmpi ne, %21, %c0_i32_20 : i32
    scf.if %22 {
      %c0_21 = arith.constant 0 : index
      %c0_22 = arith.constant 0 : index
      %23 = vector.load %arg9[%c0_21, %c0_22] : memref<16x32xf32, #tpu.memory_space<vmem>>, vector<16x32xf32>
      %c0_23 = arith.constant 0 : index
      %c0_24 = arith.constant 0 : index
      %24 = vector.load %arg8[%c0_23, %c0_24] : memref<16x32xf32, #tpu.memory_space<vmem>>, vector<16x32xf32>
      tpu.vector_store %arg8[%c0_23, %c0_24], %23 {strides = array<i32>} : memref<16x32xf32, #tpu.memory_space<vmem>>, vector<16x32xf32>,
    } else {
    }
    return
  }
  func.func @transform_0(%arg0: i32, %arg1: i32) -> (i32, i32) {
    %c0_i32 = arith.constant 0 : i32
    return %arg0, %arg1 : i32, i32
  }
  func.func @transform_1(%arg0: i32, %arg1: i32) -> (i32, i32) {
    %c0_i32 = arith.constant 0 : i32
    %c0_i32_0 = arith.constant 0 : i32
    return %arg1, %c0_i32 : i32, i32
  }
  func.func @transform_2(%arg0: i32, %arg1: i32) -> (i32, i32) {
    %c0_i32 = arith.constant 0 : i32
    %c0_i32_0 = arith.constant 0 : i32
    return %arg1, %c0_i32 : i32, i32
  }
  func.func @transform_3(%arg0: i32, %arg1: i32) -> (i32, i32) {
    %c0_i32 = arith.constant 0 : i32
    %c0_i32_0 = arith.constant 0 : i32
    %c0_i32_1 = arith.constant 0 : i32
    return %c0_i32, %c0_i32_0 : i32, i32
  }
  func.func @transform_4(%arg0: i32, %arg1: i32) -> (i32, i32) {
    %c0_i32 = arith.constant 0 : i32
    %c0_i32_0 = arith.constant 0 : i32
    %c0_i32_1 = arith.constant 0 : i32
    return %c0_i32, %c0_i32_0 : i32, i32
  }
  func.func @transform_5(%arg0: i32, %arg1: i32) -> (i32, i32) {
    %c0_i32 = arith.constant 0 : i32
    %c0_i32_0 = arith.constant 0 : i32
    %c0_i32_1 = arith.constant 0 : i32
    return %c0_i32, %c0_i32_0 : i32, i32
  }
  func.func @transform_6(%arg0: i32, %arg1: i32) -> (i32, i32) {
    %c0_i32 = arith.constant 0 : i32
    %c0_i32_0 = arith.constant 0 : i32
    return %arg0, %c0_i32 : i32, i32
  }
}

module attributes {stable_mosaic.version = 11 : i64} {
  func.func @_edge_head_kernel(%arg0: i32, %arg1: memref<32x32xf32, #tpu.memory_space<vmem>>, %arg2: memref<32x32xf32, #tpu.memory_space<vmem>>, %arg3: memref<32x32xf32, #tpu.memory_space<vmem>>, %arg4: memref<32x32xf32, #tpu.memory_space<vmem>>, %arg5: memref<32x32xf32, #tpu.memory_space<vmem>>, %arg6: memref<32x32xf32, #tpu.memory_space<vmem>>, %arg7: memref<32x1xf32, #tpu.memory_space<vmem>>, %arg8: memref<1x32xf32, #tpu.memory_space<vmem>>, %arg9: memref<1x1xf32, #tpu.memory_space<vmem>>, %arg10: memref<1x32xf32, #tpu.memory_space<vmem>>, %arg11: memref<1x32xf32, #tpu.memory_space<vmem>>, %arg12: memref<1x1xf32, #tpu.memory_space<vmem>>, %arg13: memref<1x1xf32, #tpu.memory_space<vmem>>, %arg14: memref<1x1xf32, #tpu.memory_space<vmem>>, %arg15: memref<1x1xf32, #tpu.memory_space<vmem>>, %arg16: memref<1x1xf32, #tpu.memory_space<vmem>>, %arg17: memref<1x1xf32, #tpu.memory_space<vmem>>) attributes {dimension_semantics = [#tpu.dimension_semantics<arbitrary>], iteration_bounds = array<i64: 1>, scalar_prefetch = 0 : i64, scratch_operands = 5 : i64, tpu.core_type = #tpu.core_type<tc>, window_params = [{transform_indices = @transform_0, window_bounds = array<i64: 32, 32>}, {transform_indices = @transform_1, window_bounds = array<i64: 32, 32>}, {transform_indices = @transform_2, window_bounds = array<i64: 32, 32>}, {pipeline_mode = #tpu.pipeline_mode<synchronous>, transform_indices = @transform_3, window_bounds = array<i64: 32, 32>}, {pipeline_mode = #tpu.pipeline_mode<synchronous>, transform_indices = @transform_4, window_bounds = array<i64: 32, 32>}, {pipeline_mode = #tpu.pipeline_mode<synchronous>, transform_indices = @transform_5, window_bounds = array<i64: 32, 32>}, {pipeline_mode = #tpu.pipeline_mode<synchronous>, transform_indices = @transform_6, window_bounds = array<i64: 32, 1>}, {pipeline_mode = #tpu.pipeline_mode<synchronous>, transform_indices = @transform_7, window_bounds = array<i64: 1, 32>}, {pipeline_mode = #tpu.pipeline_mode<synchronous>, transform_indices = @transform_8, window_bounds = array<i64: 1, 1>}, {transform_indices = @transform_9, window_bounds = array<i64: 1, 32>}, {transform_indices = @transform_10, window_bounds = array<i64: 1, 32>}, {pipeline_mode = #tpu.pipeline_mode<synchronous>, transform_indices = @transform_11, window_bounds = array<i64: 1, 1>}]} {
    %c0_i32 = arith.constant 0 : i32
    %0 = arith.cmpi eq, %arg0, %c0_i32 : i32
    %1 = arith.extui %0 : i1 to i32
    %c0_i32_0 = arith.constant 0 : i32
    %2 = arith.cmpi ne, %1, %c0_i32_0 : i32
    scf.if %2 {
      %cst_65 = arith.constant 0.000000e+00 : f32
      %93 = vector.broadcast %cst_65 : f32 to vector<1x1xf32>
      %c0_66 = arith.constant 0 : index
      %c0_67 = arith.constant 0 : index
      %94 = vector.load %arg13[%c0_66, %c0_67] : memref<1x1xf32, #tpu.memory_space<vmem>>, vector<1x1xf32>
      tpu.vector_store %arg13[%c0_66, %c0_67], %93 {strides = array<i32>} : memref<1x1xf32, #tpu.memory_space<vmem>>, vector<1x1xf32>,
      %cst_68 = arith.constant 0.000000e+00 : f32
      %95 = vector.broadcast %cst_68 : f32 to vector<1x1xf32>
      %c0_69 = arith.constant 0 : index
      %c0_70 = arith.constant 0 : index
      %96 = vector.load %arg14[%c0_69, %c0_70] : memref<1x1xf32, #tpu.memory_space<vmem>>, vector<1x1xf32>
      tpu.vector_store %arg14[%c0_69, %c0_70], %95 {strides = array<i32>} : memref<1x1xf32, #tpu.memory_space<vmem>>, vector<1x1xf32>,
      %cst_71 = arith.constant 0.000000e+00 : f32
      %97 = vector.broadcast %cst_71 : f32 to vector<1x1xf32>
      %c0_72 = arith.constant 0 : index
      %c0_73 = arith.constant 0 : index
      %98 = vector.load %arg15[%c0_72, %c0_73] : memref<1x1xf32, #tpu.memory_space<vmem>>, vector<1x1xf32>
      tpu.vector_store %arg15[%c0_72, %c0_73], %97 {strides = array<i32>} : memref<1x1xf32, #tpu.memory_space<vmem>>, vector<1x1xf32>,
      %cst_74 = arith.constant 0.000000e+00 : f32
      %99 = vector.broadcast %cst_74 : f32 to vector<1x1xf32>
      %c0_75 = arith.constant 0 : index
      %c0_76 = arith.constant 0 : index
      %100 = vector.load %arg16[%c0_75, %c0_76] : memref<1x1xf32, #tpu.memory_space<vmem>>, vector<1x1xf32>
      tpu.vector_store %arg16[%c0_75, %c0_76], %99 {strides = array<i32>} : memref<1x1xf32, #tpu.memory_space<vmem>>, vector<1x1xf32>,
      %cst_77 = arith.constant 0.000000e+00 : f32
      %101 = vector.broadcast %cst_77 : f32 to vector<1x1xf32>
      %c0_78 = arith.constant 0 : index
      %c0_79 = arith.constant 0 : index
      %102 = vector.load %arg17[%c0_78, %c0_79] : memref<1x1xf32, #tpu.memory_space<vmem>>, vector<1x1xf32>
      tpu.vector_store %arg17[%c0_78, %c0_79], %101 {strides = array<i32>} : memref<1x1xf32, #tpu.memory_space<vmem>>, vector<1x1xf32>,
    } else {
    }
    %c0 = arith.constant 0 : index
    %c0_1 = arith.constant 0 : index
    %3 = vector.load %arg4[%c0, %c0_1] : memref<32x32xf32, #tpu.memory_space<vmem>>, vector<32x32xf32>
    %c0_2 = arith.constant 0 : index
    %c0_3 = arith.constant 0 : index
    %4 = vector.load %arg1[%c0_2, %c0_3] : memref<32x32xf32, #tpu.memory_space<vmem>>, vector<32x32xf32>
    %cst = arith.constant dense<0.000000e+00> : vector<32x32xf32>
    %5 = tpu.matmul %3, %4, %cst {dimension_numbers = #tpu.dot_dimension_numbers<[1], [0], [0], [1], [0, 0, 1, 1], [], []>} : vector<32x32xf32>, vector<32x32xf32>, vector<32x32xf32> -> vector<32x32xf32>
    %c0_4 = arith.constant 0 : index
    %c0_5 = arith.constant 0 : index
    %6 = vector.load %arg5[%c0_4, %c0_5] : memref<32x32xf32, #tpu.memory_space<vmem>>, vector<32x32xf32>
    %c0_6 = arith.constant 0 : index
    %c0_7 = arith.constant 0 : index
    %7 = vector.load %arg2[%c0_6, %c0_7] : memref<32x32xf32, #tpu.memory_space<vmem>>, vector<32x32xf32>
    %cst_8 = arith.constant dense<0.000000e+00> : vector<32x32xf32>
    %8 = tpu.matmul %6, %7, %cst_8 {dimension_numbers = #tpu.dot_dimension_numbers<[1], [0], [0], [1], [0, 0, 1, 1], [], []>} : vector<32x32xf32>, vector<32x32xf32>, vector<32x32xf32> -> vector<32x32xf32>
    %9 = arith.addf %5, %8 : vector<32x32xf32>
    %c0_9 = arith.constant 0 : index
    %c0_10 = arith.constant 0 : index
    %10 = vector.load %arg6[%c0_9, %c0_10] : memref<32x32xf32, #tpu.memory_space<vmem>>, vector<32x32xf32>
    %c0_11 = arith.constant 0 : index
    %c0_12 = arith.constant 0 : index
    %11 = vector.load %arg3[%c0_11, %c0_12] : memref<32x32xf32, #tpu.memory_space<vmem>>, vector<32x32xf32>
    %cst_13 = arith.constant dense<0.000000e+00> : vector<32x32xf32>
    %12 = tpu.matmul %10, %11, %cst_13 {dimension_numbers = #tpu.dot_dimension_numbers<[1], [0], [0], [1], [0, 0, 1, 1], [], []>} : vector<32x32xf32>, vector<32x32xf32>, vector<32x32xf32> -> vector<32x32xf32>
    %13 = arith.addf %9, %12 : vector<32x32xf32>
    %c0_14 = arith.constant 0 : index
    %c0_15 = arith.constant 0 : index
    %14 = vector.load %arg7[%c0_14, %c0_15] : memref<32x1xf32, #tpu.memory_space<vmem>>, vector<32x1xf32>
    %15 = vector.broadcast %14 : vector<32x1xf32> to vector<32x32xf32>
    %16 = arith.addf %13, %15 : vector<32x32xf32>
    %cst_16 = arith.constant 0.000000e+00 : f32
    %17 = vector.broadcast %cst_16 : f32 to vector<32x32xf32>
    %18 = arith.maximumf %16, %17 : vector<32x32xf32>
    %c0_17 = arith.constant 0 : index
    %c0_18 = arith.constant 0 : index
    %19 = vector.load %arg8[%c0_17, %c0_18] : memref<1x32xf32, #tpu.memory_space<vmem>>, vector<1x32xf32>
    %cst_19 = arith.constant dense<0.000000e+00> : vector<1x32xf32>
    %20 = tpu.matmul %19, %18, %cst_19 {dimension_numbers = #tpu.dot_dimension_numbers<[1], [0], [0], [1], [0, 0, 1, 1], [], []>} : vector<1x32xf32>, vector<32x32xf32>, vector<1x32xf32> -> vector<1x32xf32>
    %c0_20 = arith.constant 0 : index
    %c0_21 = arith.constant 0 : index
    %21 = vector.load %arg9[%c0_20, %c0_21] : memref<1x1xf32, #tpu.memory_space<vmem>>, vector<1x1xf32>
    %22 = vector.broadcast %21 : vector<1x1xf32> to vector<1x32xf32>
    %23 = arith.addf %20, %22 : vector<1x32xf32>
    %24 = arith.negf %23 : vector<1x32xf32>
    %25 = math.exp %24 : vector<1x32xf32>
    %cst_22 = arith.constant 1.000000e+00 : f32
    %26 = vector.broadcast %cst_22 : f32 to vector<1x32xf32>
    %27 = arith.addf %26, %25 : vector<1x32xf32>
    %28 = arith.divf %26, %27 : vector<1x32xf32>
    %c32_i32 = arith.constant 32 : i32
    %29 = arith.muli %arg0, %c32_i32 : i32
    %30 = tpu.iota {dimensions = array<i32: 1>} : vector<1x32xi32>
    %31 = vector.broadcast %29 : i32 to vector<1x32xi32>
    %32 = arith.addi %31, %30 : vector<1x32xi32>
    %c32_i32_23 = arith.constant 32 : i32
    %33 = vector.broadcast %c32_i32_23 : i32 to vector<1x32xi32>
    %34 = arith.cmpi slt, %32, %33 : vector<1x32xi32>
    %cst_24 = arith.constant 0.000000e+00 : f32
    %35 = vector.broadcast %cst_24 : f32 to vector<1x32xf32>
    %36 = arith.select %34, %28, %35 : vector<1x32xi1>, vector<1x32xf32>
    %c0_25 = arith.constant 0 : index
    %c0_26 = arith.constant 0 : index
    %37 = vector.load %arg11[%c0_25, %c0_26] : memref<1x32xf32, #tpu.memory_space<vmem>>, vector<1x32xf32>
    tpu.vector_store %arg11[%c0_25, %c0_26], %36 {strides = array<i32>} : memref<1x32xf32, #tpu.memory_space<vmem>>, vector<1x32xf32>,
    %38 = arith.mulf %36, %36 : vector<1x32xf32>
    %c0_27 = arith.constant 0 : index
    %c0_28 = arith.constant 0 : index
    %39 = vector.load %arg13[%c0_27, %c0_28] : memref<1x1xf32, #tpu.memory_space<vmem>>, vector<1x1xf32>
    %cst_29 = arith.constant dense<0.000000e+00> : vector<1xf32>
    %40 = vector.multi_reduction <add>, %36, %cst_29 [1] : vector<1x32xf32> to vector<1xf32>
    %41 = vector.shape_cast %40 : vector<1xf32> to vector<1x1xf32>
    %42 = arith.addf %39, %41 : vector<1x1xf32>
    %c0_30 = arith.constant 0 : index
    %c0_31 = arith.constant 0 : index
    %43 = vector.load %arg13[%c0_30, %c0_31] : memref<1x1xf32, #tpu.memory_space<vmem>>, vector<1x1xf32>
    tpu.vector_store %arg13[%c0_30, %c0_31], %42 {strides = array<i32>} : memref<1x1xf32, #tpu.memory_space<vmem>>, vector<1x1xf32>,
    %c0_32 = arith.constant 0 : index
    %c0_33 = arith.constant 0 : index
    %44 = vector.load %arg14[%c0_32, %c0_33] : memref<1x1xf32, #tpu.memory_space<vmem>>, vector<1x1xf32>
    %cst_34 = arith.constant dense<0.000000e+00> : vector<1xf32>
    %45 = vector.multi_reduction <add>, %38, %cst_34 [1] : vector<1x32xf32> to vector<1xf32>
    %46 = vector.shape_cast %45 : vector<1xf32> to vector<1x1xf32>
    %47 = arith.addf %44, %46 : vector<1x1xf32>
    %c0_35 = arith.constant 0 : index
    %c0_36 = arith.constant 0 : index
    %48 = vector.load %arg14[%c0_35, %c0_36] : memref<1x1xf32, #tpu.memory_space<vmem>>, vector<1x1xf32>
    tpu.vector_store %arg14[%c0_35, %c0_36], %47 {strides = array<i32>} : memref<1x1xf32, #tpu.memory_space<vmem>>, vector<1x1xf32>,
    %c0_37 = arith.constant 0 : index
    %c0_38 = arith.constant 0 : index
    %49 = vector.load %arg15[%c0_37, %c0_38] : memref<1x1xf32, #tpu.memory_space<vmem>>, vector<1x1xf32>
    %50 = arith.mulf %38, %36 : vector<1x32xf32>
    %cst_39 = arith.constant dense<0.000000e+00> : vector<1xf32>
    %51 = vector.multi_reduction <add>, %50, %cst_39 [1] : vector<1x32xf32> to vector<1xf32>
    %52 = vector.shape_cast %51 : vector<1xf32> to vector<1x1xf32>
    %53 = arith.addf %49, %52 : vector<1x1xf32>
    %c0_40 = arith.constant 0 : index
    %c0_41 = arith.constant 0 : index
    %54 = vector.load %arg15[%c0_40, %c0_41] : memref<1x1xf32, #tpu.memory_space<vmem>>, vector<1x1xf32>
    tpu.vector_store %arg15[%c0_40, %c0_41], %53 {strides = array<i32>} : memref<1x1xf32, #tpu.memory_space<vmem>>, vector<1x1xf32>,
    %c0_42 = arith.constant 0 : index
    %c0_43 = arith.constant 0 : index
    %55 = vector.load %arg16[%c0_42, %c0_43] : memref<1x1xf32, #tpu.memory_space<vmem>>, vector<1x1xf32>
    %56 = arith.mulf %38, %38 : vector<1x32xf32>
    %cst_44 = arith.constant dense<0.000000e+00> : vector<1xf32>
    %57 = vector.multi_reduction <add>, %56, %cst_44 [1] : vector<1x32xf32> to vector<1xf32>
    %58 = vector.shape_cast %57 : vector<1xf32> to vector<1x1xf32>
    %59 = arith.addf %55, %58 : vector<1x1xf32>
    %c0_45 = arith.constant 0 : index
    %c0_46 = arith.constant 0 : index
    %60 = vector.load %arg16[%c0_45, %c0_46] : memref<1x1xf32, #tpu.memory_space<vmem>>, vector<1x1xf32>
    tpu.vector_store %arg16[%c0_45, %c0_46], %59 {strides = array<i32>} : memref<1x1xf32, #tpu.memory_space<vmem>>, vector<1x1xf32>,
    %c0_47 = arith.constant 0 : index
    %c0_48 = arith.constant 0 : index
    %61 = vector.load %arg10[%c0_47, %c0_48] : memref<1x32xf32, #tpu.memory_space<vmem>>, vector<1x32xf32>
    %cst_49 = arith.constant 5.000000e-01 : f32
    %62 = vector.broadcast %cst_49 : f32 to vector<1x32xf32>
    %63 = arith.cmpf ogt, %28, %62 : vector<1x32xf32>
    %cst_50 = arith.constant 1.000000e+00 : f32
    %cst_51 = arith.constant 1.000000e+00 : f32
    %64 = vector.broadcast %cst_50 : f32 to vector<1x32xf32>
    %65 = vector.broadcast %cst_51 : f32 to vector<1x32xf32>
    %66 = arith.select %63, %64, %65 : vector<1x32xi1>, vector<1x32xf32>
    %67 = math.log %28 : vector<1x32xf32>
    %cst_52 = arith.constant -1.000000e+02 : f32
    %68 = vector.broadcast %cst_52 : f32 to vector<1x32xf32>
    %69 = arith.maximumf %67, %68 : vector<1x32xf32>
    %cst_53 = arith.constant 1.000000e+00 : f32
    %70 = vector.broadcast %cst_53 : f32 to vector<1x32xf32>
    %71 = arith.subf %70, %28 : vector<1x32xf32>
    %72 = math.log %71 : vector<1x32xf32>
    %cst_54 = arith.constant -1.000000e+02 : f32
    %73 = vector.broadcast %cst_54 : f32 to vector<1x32xf32>
    %74 = arith.maximumf %72, %73 : vector<1x32xf32>
    %75 = arith.mulf %61, %69 : vector<1x32xf32>
    %cst_55 = arith.constant 1.000000e+00 : f32
    %76 = vector.broadcast %cst_55 : f32 to vector<1x32xf32>
    %77 = arith.subf %76, %61 : vector<1x32xf32>
    %78 = arith.mulf %77, %74 : vector<1x32xf32>
    %79 = arith.addf %75, %78 : vector<1x32xf32>
    %cst_56 = arith.constant 0.000000e+00 : f32
    %80 = vector.broadcast %cst_56 : f32 to vector<1x32xf32>
    %81 = arith.subf %80, %79 : vector<1x32xf32>
    %82 = arith.mulf %66, %81 : vector<1x32xf32>
    %c0_57 = arith.constant 0 : index
    %c0_58 = arith.constant 0 : index
    %83 = vector.load %arg17[%c0_57, %c0_58] : memref<1x1xf32, #tpu.memory_space<vmem>>, vector<1x1xf32>
    %cst_59 = arith.constant 0.000000e+00 : f32
    %84 = vector.broadcast %cst_59 : f32 to vector<1x32xf32>
    %85 = arith.select %34, %82, %84 : vector<1x32xi1>, vector<1x32xf32>
    %cst_60 = arith.constant dense<0.000000e+00> : vector<1xf32>
    %86 = vector.multi_reduction <add>, %85, %cst_60 [1] : vector<1x32xf32> to vector<1xf32>
    %87 = vector.shape_cast %86 : vector<1xf32> to vector<1x1xf32>
    %88 = arith.addf %83, %87 : vector<1x1xf32>
    %c0_61 = arith.constant 0 : index
    %c0_62 = arith.constant 0 : index
    %89 = vector.load %arg17[%c0_61, %c0_62] : memref<1x1xf32, #tpu.memory_space<vmem>>, vector<1x1xf32>
    tpu.vector_store %arg17[%c0_61, %c0_62], %88 {strides = array<i32>} : memref<1x1xf32, #tpu.memory_space<vmem>>, vector<1x1xf32>,
    %c0_i32_63 = arith.constant 0 : i32
    %90 = arith.cmpi eq, %arg0, %c0_i32_63 : i32
    %91 = arith.extui %90 : i1 to i32
    %c0_i32_64 = arith.constant 0 : i32
    %92 = arith.cmpi ne, %91, %c0_i32_64 : i32
    scf.if %92 {
      %c0_65 = arith.constant 0 : index
      %c0_66 = arith.constant 0 : index
      %93 = vector.load %arg13[%c0_65, %c0_66] : memref<1x1xf32, #tpu.memory_space<vmem>>, vector<1x1xf32>
      %cst_67 = arith.constant 3.200000e+01 : f32
      %94 = vector.broadcast %cst_67 : f32 to vector<1x1xf32>
      %95 = arith.divf %93, %94 : vector<1x1xf32>
      %96 = arith.mulf %95, %95 : vector<1x1xf32>
      %c0_68 = arith.constant 0 : index
      %c0_69 = arith.constant 0 : index
      %97 = vector.load %arg16[%c0_68, %c0_69] : memref<1x1xf32, #tpu.memory_space<vmem>>, vector<1x1xf32>
      %cst_70 = arith.constant 3.200000e+01 : f32
      %98 = vector.broadcast %cst_70 : f32 to vector<1x1xf32>
      %99 = arith.divf %97, %98 : vector<1x1xf32>
      %cst_71 = arith.constant 4.000000e+00 : f32
      %100 = vector.broadcast %cst_71 : f32 to vector<1x1xf32>
      %101 = arith.mulf %100, %95 : vector<1x1xf32>
      %c0_72 = arith.constant 0 : index
      %c0_73 = arith.constant 0 : index
      %102 = vector.load %arg15[%c0_72, %c0_73] : memref<1x1xf32, #tpu.memory_space<vmem>>, vector<1x1xf32>
      %cst_74 = arith.constant 3.200000e+01 : f32
      %103 = vector.broadcast %cst_74 : f32 to vector<1x1xf32>
      %104 = arith.divf %102, %103 : vector<1x1xf32>
      %105 = arith.mulf %101, %104 : vector<1x1xf32>
      %106 = arith.subf %99, %105 : vector<1x1xf32>
      %cst_75 = arith.constant 6.000000e+00 : f32
      %107 = vector.broadcast %cst_75 : f32 to vector<1x1xf32>
      %108 = arith.mulf %107, %96 : vector<1x1xf32>
      %c0_76 = arith.constant 0 : index
      %c0_77 = arith.constant 0 : index
      %109 = vector.load %arg14[%c0_76, %c0_77] : memref<1x1xf32, #tpu.memory_space<vmem>>, vector<1x1xf32>
      %cst_78 = arith.constant 3.200000e+01 : f32
      %110 = vector.broadcast %cst_78 : f32 to vector<1x1xf32>
      %111 = arith.divf %109, %110 : vector<1x1xf32>
      %112 = arith.mulf %108, %111 : vector<1x1xf32>
      %113 = arith.addf %106, %112 : vector<1x1xf32>
      %cst_79 = arith.constant 3.000000e+00 : f32
      %114 = vector.broadcast %cst_79 : f32 to vector<1x1xf32>
      %115 = arith.mulf %114, %96 : vector<1x1xf32>
      %116 = arith.mulf %115, %96 : vector<1x1xf32>
      %117 = arith.subf %113, %116 : vector<1x1xf32>
      %cst_80 = arith.constant 0.000000e+00 : f32
      %118 = vector.broadcast %cst_80 : f32 to vector<1x1xf32>
      %119 = arith.maximumf %117, %118 : vector<1x1xf32>
      %120 = math.sqrt %119 : vector<1x1xf32>
      %121 = math.sqrt %120 : vector<1x1xf32>
      %cst_81 = arith.constant 0.000000e+00 : f32
      %122 = vector.broadcast %cst_81 : f32 to vector<1x1xf32>
      %123 = arith.subf %122, %121 : vector<1x1xf32>
      %c0_82 = arith.constant 0 : index
      %c0_83 = arith.constant 0 : index
      %124 = vector.load %arg17[%c0_82, %c0_83] : memref<1x1xf32, #tpu.memory_space<vmem>>, vector<1x1xf32>
      %cst_84 = arith.constant 3.200000e+01 : f32
      %125 = vector.broadcast %cst_84 : f32 to vector<1x1xf32>
      %126 = arith.divf %124, %125 : vector<1x1xf32>
      %cst_85 = arith.constant 1.000000e-01 : f32
      %127 = vector.broadcast %cst_85 : f32 to vector<1x1xf32>
      %128 = arith.mulf %123, %127 : vector<1x1xf32>
      %129 = arith.addf %126, %128 : vector<1x1xf32>
      %c0_86 = arith.constant 0 : index
      %c0_87 = arith.constant 0 : index
      %130 = vector.load %arg12[%c0_86, %c0_87] : memref<1x1xf32, #tpu.memory_space<vmem>>, vector<1x1xf32>
      tpu.vector_store %arg12[%c0_86, %c0_87], %129 {strides = array<i32>} : memref<1x1xf32, #tpu.memory_space<vmem>>, vector<1x1xf32>,
    } else {
    }
    return
  }
  func.func @transform_0(%arg0: i32) -> (i32, i32) {
    %c0_i32 = arith.constant 0 : i32
    %c0_i32_0 = arith.constant 0 : i32
    return %c0_i32, %arg0 : i32, i32
  }
  func.func @transform_1(%arg0: i32) -> (i32, i32) {
    %c0_i32 = arith.constant 0 : i32
    %c0_i32_0 = arith.constant 0 : i32
    return %c0_i32, %arg0 : i32, i32
  }
  func.func @transform_2(%arg0: i32) -> (i32, i32) {
    %c0_i32 = arith.constant 0 : i32
    %c0_i32_0 = arith.constant 0 : i32
    return %c0_i32, %arg0 : i32, i32
  }
  func.func @transform_3(%arg0: i32) -> (i32, i32) {
    %c0_i32 = arith.constant 0 : i32
    %c0_i32_0 = arith.constant 0 : i32
    %c0_i32_1 = arith.constant 0 : i32
    return %c0_i32, %c0_i32_0 : i32, i32
  }
  func.func @transform_4(%arg0: i32) -> (i32, i32) {
    %c0_i32 = arith.constant 0 : i32
    %c0_i32_0 = arith.constant 0 : i32
    %c0_i32_1 = arith.constant 0 : i32
    return %c0_i32, %c0_i32_0 : i32, i32
  }
  func.func @transform_5(%arg0: i32) -> (i32, i32) {
    %c0_i32 = arith.constant 0 : i32
    %c0_i32_0 = arith.constant 0 : i32
    %c0_i32_1 = arith.constant 0 : i32
    return %c0_i32, %c0_i32_0 : i32, i32
  }
  func.func @transform_6(%arg0: i32) -> (i32, i32) {
    %c0_i32 = arith.constant 0 : i32
    %c0_i32_0 = arith.constant 0 : i32
    %c0_i32_1 = arith.constant 0 : i32
    return %c0_i32, %c0_i32_0 : i32, i32
  }
  func.func @transform_7(%arg0: i32) -> (i32, i32) {
    %c0_i32 = arith.constant 0 : i32
    %c0_i32_0 = arith.constant 0 : i32
    %c0_i32_1 = arith.constant 0 : i32
    return %c0_i32, %c0_i32_0 : i32, i32
  }
  func.func @transform_8(%arg0: i32) -> (i32, i32) {
    %c0_i32 = arith.constant 0 : i32
    %c0_i32_0 = arith.constant 0 : i32
    %c0_i32_1 = arith.constant 0 : i32
    return %c0_i32, %c0_i32_0 : i32, i32
  }
  func.func @transform_9(%arg0: i32) -> (i32, i32) {
    %c0_i32 = arith.constant 0 : i32
    %c0_i32_0 = arith.constant 0 : i32
    return %c0_i32, %arg0 : i32, i32
  }
  func.func @transform_10(%arg0: i32) -> (i32, i32) {
    %c0_i32 = arith.constant 0 : i32
    %c0_i32_0 = arith.constant 0 : i32
    return %c0_i32, %arg0 : i32, i32
  }
  func.func @transform_11(%arg0: i32) -> (i32, i32) {
    %c0_i32 = arith.constant 0 : i32
    %c0_i32_0 = arith.constant 0 : i32
    %c0_i32_1 = arith.constant 0 : i32
    return %c0_i32, %c0_i32_0 : i32, i32
  }
}

</mosaic_0001>

<llo_original>
// kernel: sub.6
$region0: #{sub.6}
  #allocation0 [shape = 's32[1]{0}', space=sflag, size = 0x4, scoped, tag = 'scoped memory for sub.6']
  %s0 = inlined_call_operand.vmem [shape: f32[64,8], index: 0, kind: input, shape index: {}]
  %s1 = inlined_call_operand.vmem [shape: f32[64,8], index: 1, kind: input, shape index: {}]
  %s2 = inlined_call_operand.vmem [shape: f32[64,8], index: 2, kind: output, shape index: {}]
  %v3 = vld [vmem:[%s0] sm:$0xff]
  %v4 = vld [vmem:[%s1] sm:$0xff]
  %5 = xla_tuple %v3, %v4
  %6 = xla_tuple %5
  %v7 = vsub.f32 %v3, %v4
  %8 = xla_tuple %v7
  %9 = vst [vmem:[%s2] sm:$0xff] %v7
  %s10 = scalar_lea.vmem %s0, 8
  %v11 = vld [vmem:[%s10] sm:$0xff]
  %s12 = scalar_lea.vmem %s1, 8
  %v13 = vld [vmem:[%s12] sm:$0xff]
  %14 = xla_tuple %v11, %v13
  %15 = xla_tuple %14
  %v16 = vsub.f32 %v11, %v13
  %17 = xla_tuple %v16
  %s18 = scalar_lea.vmem %s2, 8
  %19 = vst [vmem:[%s18] sm:$0xff] %v16
  %s20 = scalar_lea.vmem %s0, 16
  %v21 = vld [vmem:[%s20] sm:$0xff]
  %s22 = scalar_lea.vmem %s1, 16
  %v23 = vld [vmem:[%s22] sm:$0xff]
  %24 = xla_tuple %v21, %v23
  %25 = xla_tuple %24
  %v26 = vsub.f32 %v21, %v23
  %27 = xla_tuple %v26
  %s28 = scalar_lea.vmem %s2, 16
  %29 = vst [vmem:[%s28] sm:$0xff] %v26
  %s30 = scalar_lea.vmem %s0, 24
  %v31 = vld [vmem:[%s30] sm:$0xff]
  %s32 = scalar_lea.vmem %s1, 24
  %v33 = vld [vmem:[%s32] sm:$0xff]
  %34 = xla_tuple %v31, %v33
  %35 = xla_tuple %34
  %v36 = vsub.f32 %v31, %v33
  %37 = xla_tuple %v36
  %s38 = scalar_lea.vmem %s2, 24
  %39 = vst [vmem:[%s38] sm:$0xff] %v36
  %s40 = scalar_lea.vmem %s0, 32
  %v41 = vld [vmem:[%s40] sm:$0xff]
  %s42 = scalar_lea.vmem %s1, 32
  %v43 = vld [vmem:[%s42] sm:$0xff]
  %44 = xla_tuple %v41, %v43
  %45 = xla_tuple %44
  %v46 = vsub.f32 %v41, %v43
  %47 = xla_tuple %v46
  %s48 = scalar_lea.vmem %s2, 32
  %49 = vst [vmem:[%s48] sm:$0xff] %v46
  %s50 = scalar_lea.vmem %s0, 40
  %v51 = vld [vmem:[%s50] sm:$0xff]
  %s52 = scalar_lea.vmem %s1, 40
  %v53 = vld [vmem:[%s52] sm:$0xff]
  %54 = xla_tuple %v51, %v53
  %55 = xla_tuple %54
  %v56 = vsub.f32 %v51, %v53
  %57 = xla_tuple %v56
  %s58 = scalar_lea.vmem %s2, 40
  %59 = vst [vmem:[%s58] sm:$0xff] %v56
  %s60 = scalar_lea.vmem %s0, 48
  %v61 = vld [vmem:[%s60] sm:$0xff]
  %s62 = scalar_lea.vmem %s1, 48
  %v63 = vld [vmem:[%s62] sm:$0xff]
  %64 = xla_tuple %v61, %v63
  %65 = xla_tuple %64
  %v66 = vsub.f32 %v61, %v63
  %67 = xla_tuple %v66
  %s68 = scalar_lea.vmem %s2, 48
  %69 = vst [vmem:[%s68] sm:$0xff] %v66
  %s70 = scalar_lea.vmem %s0, 56
  %v71 = vld [vmem:[%s70] sm:$0xff]
  %s72 = scalar_lea.vmem %s1, 56
  %v73 = vld [vmem:[%s72] sm:$0xff]
  %74 = xla_tuple %v71, %v73
  %75 = xla_tuple %74
  %v76 = vsub.f32 %v71, %v73
  %77 = xla_tuple %v76
  %s78 = scalar_lea.vmem %s2, 56
  %79 = vst [vmem:[%s78] sm:$0xff] %v76

// kernel: gcn_edge_based_forward.4
$region0: #{gcn_edge_based_forward.4}
  #allocation0 [shape = 'u32[]', space=smem, size = 0x4, offset = 0x4, fixed_abs, tag = 'smem constant byte address 0x4 - core index']
  #allocation1 [shape = 'u32[144,128]{1,0:T(1,128)}', space=vmem, size = 0x12000, scoped, tag = 'internal scratch']
  #allocation2 [shape = 'f32[16,32]{1,0:T(8,128)}', space=vmem, size = 0x2000, scoped, tag = 'scratch operand']
  %s0 = inlined_call_operand.vmem [shape: f32[16,64], index: 0, kind: input, shape index: {}]
  %s1 = inlined_call_operand.vmem [shape: f32[64,8], index: 1, kind: input, shape index: {}]
  %s2 = inlined_call_operand.vmem [shape: f32[64,8], index: 2, kind: input, shape index: {}]
  %s3 = inlined_call_operand.vmem [shape: f32[8,32], index: 3, kind: input, shape index: {}]
  %s4 = inlined_call_operand.vmem [shape: f32[8,32], index: 4, kind: input, shape index: {}]
  %s5 = inlined_call_operand.vmem [shape: f32[1,32], index: 5, kind: input, shape index: {}]
  %s6 = inlined_call_operand.vmem [shape: f32[16,32], index: 6, kind: output, shape index: {}]
  %s7 = sld [smem:[#allocation0]]
  $region42: #{gcn_edge_based_forward.4} parent=0
    _
  %s9 = ssub.s32 1, %s7
  %s10 = scalar_select 0, %s9, %s7
  // Predicated region
  $region2: #{gcn_edge_based_forward.4} parent=0 // pred_check
    _
  $region3: #{gcn_edge_based_forward.4} parent=0 // pred_check_branch
    %12 = sbr.rel (0) target = $region5
  $region4: #{gcn_edge_based_forward.4} parent=0 // pred_region
    _
  $region5: #{gcn_edge_based_forward.4} parent=0 // pred_fallthru
    _
  // Predicated region
  $region6: #{gcn_edge_based_forward.4} parent=0 // pred_check
    _
  $region7: #{gcn_edge_based_forward.4} parent=0 // pred_check_branch
    %14 = sbr.rel (0) target = $region9
  $region8: #{gcn_edge_based_forward.4} parent=0 // pred_region
    _
  $region9: #{gcn_edge_based_forward.4} parent=0 // pred_fallthru
    _
  // Predicated region
  $region10: #{gcn_edge_based_forward.4} parent=0 // pred_check
    _
  $region11: #{gcn_edge_based_forward.4} parent=0 // pred_check_branch
    %16 = sbr.rel (0) target = $region13
  $region12: #{gcn_edge_based_forward.4} parent=0 // pred_region
    _
  $region13: #{gcn_edge_based_forward.4} parent=0 // pred_fallthru
    _
  // Predicated region
  $region14: #{gcn_edge_based_forward.4} parent=0 // pred_check
    _
  $region15: #{gcn_edge_based_forward.4} parent=0 // pred_check_branch
    %18 = sbr.rel (0) target = $region17
  $region16: #{gcn_edge_based_forward.4} parent=0 // pred_region
    _
  $region17: #{gcn_edge_based_forward.4} parent=0 // pred_fallthru
    _
  // Predicated region
  $region18: #{gcn_edge_based_forward.4} parent=0 // pred_check
    _
  $region19: #{gcn_edge_based_forward.4} parent=0 // pred_check_branch
    %20 = sbr.rel (0) target = $region21
  $region20: #{gcn_edge_based_forward.4} parent=0 // pred_region
    _
  $region21: #{gcn_edge_based_forward.4} parent=0 // pred_fallthru
    _
  // Predicated region
  $region22: #{gcn_edge_based_forward.4} parent=0 // pred_check
    _
  $region23: #{gcn_edge_based_forward.4} parent=0 // pred_check_branch
    %22 = sbr.rel (0) target = $region25
  $region24: #{gcn_edge_based_forward.4} parent=0 // pred_region
    _
  $region25: #{gcn_edge_based_forward.4} parent=0 // pred_fallthru
    _
  %p23 = scmp.eq.s32.totalorder 0, 0
  // Predicated region
  $region26: #{gcn_edge_based_forward.4} parent=0 // pred_check
    %p24 = pneg %p23
  $region27: #{gcn_edge_based_forward.4} parent=0 // pred_check_branch
    %26 = sbr.rel (%p24) target = $region29
  $region28: #{gcn_edge_based_forward.4} parent=0 // pred_region
    %vm27 = vcmask 261120
    %28 = vst.msk [vmem:[#allocation2] sm:$0xff] %vm27, 0.0
    %29 = vst.msk [vmem:[#allocation2 + $0x8] sm:$0xff] %vm27, 0.0
  $region29: #{gcn_edge_based_forward.4} parent=0 // pred_fallthru
    _
  %v30 = vld [vmem:[%s2] sm:$0xff]
  %v31 = vld [vmem:[%s2 + $0x8] sm:$0xff]
  %v32 = vld [vmem:[%s2 + $0x10] sm:$0xff]
  %v33 = vld [vmem:[%s2 + $0x18] sm:$0xff]
  %v34 = vld [vmem:[%s2 + $0x20] sm:$0xff]
  %v35 = vld [vmem:[%s2 + $0x28] sm:$0xff]
  %v36 = vld [vmem:[%s2 + $0x30] sm:$0xff]
  %v37 = vld [vmem:[%s2 + $0x38] sm:$0xff]
  %v38 = vld [vmem:[%s4] sm:$0xff]
  %v39 = vld [vmem:[%s5] sm:$0x1]
  %v41 = vlaneseq
  %v42 = vshrl.u32 %v41, 7
  %v43 = vsub.s32 0, %v42
  %v44 = vrot.slane %v39, %v43
  %vm46 = vcmask 64512
  %v48 = vsel %vm46, %v30, 0
  %v51 = vsel %vm46, %v31, 0
  %v54 = vsel %vm46, %v32, 0
  %v57 = vsel %vm46, %v33, 0
  %v60 = vsel %vm46, %v34, 0
  %v63 = vsel %vm46, %v35, 0
  %v66 = vsel %vm46, %v36, 0
  %v69 = vsel %vm46, %v37, 0
  %71 = vmatprep.subr.mxu0 0.0
  %72 = vmatpush1.msra.mxu0 %v38
  %73 = vmatprep.subr.mxu0 0.0
  %74 = vmatpush1.msra.mxu0 0.0
  %75 = vmatprep.subr.mxu0 0.0
  %76 = vmatpush1.msra.mxu0 0.0
  %77 = vmatprep.subr.mxu0 0.0
  %78 = vmatpush1.msra.mxu0 0.0
  %79 = vmatprep.subr.mxu0 0.0
  %80 = vmatpush1.msra.mxu0 0.0
  %81 = vmatprep.subr.mxu0 0.0
  %82 = vmatpush1.msra.mxu0 0.0
  %83 = vmatprep.subr.mxu0 0.0
  %84 = vmatpush1.msra.mxu0 0.0
  %85 = vmatprep.subr.mxu0 0.0
  %86 = vmatpush1.msra.mxu0 0.0
  %87 = vmatprep.subr.mxu0 0.0
  %88 = vmatpush1.msra.mxu0 0.0
  %89 = vmatprep.subr.mxu0 0.0
  %90 = vmatpush1.msra.mxu0 0.0
  %91 = vmatprep.subr.mxu0 0.0
  %92 = vmatpush1.msra.mxu0 0.0
  %93 = vmatprep.subr.mxu0 0.0
  %94 = vmatpush1.msra.mxu0 0.0
  %95 = vmatprep.subr.mxu0 0.0
  %96 = vmatpush1.msra.mxu0 0.0
  %97 = vmatprep.subr.mxu0 0.0
  %98 = vmatpush1.msra.mxu0 0.0
  %99 = vmatprep.subr.mxu0 0.0
  %100 = vmatpush1.msra.mxu0 0.0
  %101 = vmatprep.subr.mxu0 0.0
  %102 = vmatpush1.msra.mxu0 0.0
  %103 = vmatprep.subr.mxu0 0.0
  %104 = vmatpush1.msra.mxu0 0.0
  %105 = vmatprep.subr.mxu0 0.0
  %106 = vmatpush1.msra.mxu0 0.0
  %107 = vmatprep.subr.mxu0 0.0
  %108 = vmatpush1.msra.mxu0 0.0
  %109 = vmatprep.subr.mxu0 0.0
  %110 = vmatpush1.msra.mxu0 0.0
  %111 = vmatprep.subr.mxu0 0.0
  %112 = vmatpush1.msra.mxu0 0.0
  %113 = vmatprep.subr.mxu0 0.0
  %114 = vmatpush1.msra.mxu0 0.0
  %115 = vmatprep.subr.mxu0 0.0
  %116 = vmatpush1.msra.mxu0 0.0
  %117 = vmatprep.subr.mxu0 0.0
  %118 = vmatpush1.msra.mxu0 0.0
  %119 = vmatprep.subr.mxu0 0.0
  %120 = vmatpush1.msra.mxu0 0.0
  %121 = vmatprep.subr.mxu0 0.0
  %122 = vmatpush1.msra.mxu0 0.0
  %123 = vmatprep.subr.mxu0 0.0
  %124 = vmatpush1.msra.mxu0 0.0
  %125 = vmatprep.subr.mxu0 0.0
  %126 = vmatpush1.msra.mxu0 0.0
  %127 = vmatprep.subr.mxu0 0.0
  %128 = vmatpush1.msra.mxu0 0.0
  %129 = vmatprep.subr.mxu0 0.0
  %130 = vmatpush1.msra.mxu0 0.0
  %131 = vmatprep.subr.mxu0 0.0
  %132 = vmatpush1.msra.mxu0 0.0
  %133 = vmatprep.subr.mxu0 0.0
  %134 = vmatpush1.msra.mxu0 0.0
  %135 = vmatprep.mubr.f32.mxu0 0.0
  %136 = vmatmul.mubr.f32.gmra.mrb[0].mxu0 %v48
  %v137 = vpop.f32.mrb[0].mxu0
  %v138 = vadd.f32 %v44, %v137
  %v139 = vpop.f32.mrb[0].mxu0
  %140 = vmatprep.mubr.f32.mxu0 0.0
  %141 = vmatmul.mubr.f32.gmra.mrb[0].mxu0 %v51
  %v142 = vpop.f32.mrb[0].mxu0
  %v143 = vadd.f32 %v44, %v142
  %v144 = vpop.f32.mrb[0].mxu0
  %145 = vmatprep.mubr.f32.mxu0 0.0
  %146 = vmatmul.mubr.f32.gmra.mrb[0].mxu0 %v54
  %v147 = vpop.f32.mrb[0].mxu0
  %v148 = vadd.f32 %v44, %v147
  %v149 = vpop.f32.mrb[0].mxu0
  %150 = vmatprep.mubr.f32.mxu0 0.0
  %151 = vmatmul.mubr.f32.gmra.mrb[0].mxu0 %v57
  %v152 = vpop.f32.mrb[0].mxu0
  %v153 = vadd.f32 %v44, %v152
  %v154 = vpop.f32.mrb[0].mxu0
  %155 = vmatprep.mubr.f32.mxu0 0.0
  %156 = vmatmul.mubr.f32.gmra.mrb[0].mxu0 %v60
  %v157 = vpop.f32.mrb[0].mxu0
  %v158 = vadd.f32 %v44, %v157
  %v159 = vpop.f32.mrb[0].mxu0
  %160 = vmatprep.mubr.f32.mxu0 0.0
  %161 = vmatmul.mubr.f32.gmra.mrb[0].mxu0 %v63
  %v162 = vpop.f32.mrb[0].mxu0
  %v163 = vadd.f32 %v44, %v162
  %v164 = vpop.f32.mrb[0].mxu0
  %165 = vmatprep.mubr.f32.mxu0 0.0
  %166 = vmatmul.mubr.f32.gmra.mrb[0].mxu0 %v66
  %v167 = vpop.f32.mrb[0].mxu0
  %v168 = vadd.f32 %v44, %v167
  %v169 = vpop.f32.mrb[0].mxu0
  %170 = vmatprep.mubr.f32.mxu0 0.0
  %171 = vmatmul.mubr.f32.gmra.mrb[0].mxu0 %v69
  %v172 = vpop.f32.mrb[0].mxu0
  %v173 = vadd.f32 %v44, %v172
  %v174 = vpop.f32.mrb[0].mxu0
  %175 = vdwg.mxu0
  %v176 = vmax.f32 %v138, 0.0
  %v177 = vmax.f32 %v143, 0.0
  %v178 = vmax.f32 %v148, 0.0
  %v179 = vmax.f32 %v153, 0.0
  %v180 = vmax.f32 %v158, 0.0
  %v181 = vmax.f32 %v163, 0.0
  %v182 = vmax.f32 %v168, 0.0
  %v183 = vmax.f32 %v173, 0.0
  %v184 = vld [vmem:[#allocation2] sm:$0xff]
  %v185 = vld [vmem:[#allocation2 + $0x8] sm:$0xff]
  %v186 = vld [vmem:[%s0] sm:$0xff]
  %v187 = vld [vmem:[%s0 + $0x8] sm:$0xff]
  %vm188 = vcmask 523264
  %v190 = vsel %vm188, %v186, 0
  %v193 = vsel %vm188, %v187, 0
  %195 = vmatprep.subr.mxu0 0.0
  %196 = vmatpush1.msra.mxu0 %v176
  %197 = vmatprep.subr.mxu0 0.0
  %198 = vmatpush1.msra.mxu0 %v177
  %199 = vmatprep.subr.mxu0 0.0
  %200 = vmatpush1.msra.mxu0 %v178
  %201 = vmatprep.subr.mxu0 0.0
  %202 = vmatpush1.msra.mxu0 %v179
  %203 = vmatprep.subr.mxu0 0.0
  %204 = vmatpush1.msra.mxu0 %v180
  %205 = vmatprep.subr.mxu0 0.0
  %206 = vmatpush1.msra.mxu0 %v181
  %207 = vmatprep.subr.mxu0 0.0
  %208 = vmatpush1.msra.mxu0 %v182
  %209 = vmatprep.subr.mxu0 0.0
  %210 = vmatpush1.msra.mxu0 %v183
  %211 = vmatprep.subr.mxu0 0.0
  %212 = vmatpush1.msra.mxu0 0.0
  %213 = vmatprep.subr.mxu0 0.0
  %214 = vmatpush1.msra.mxu0 0.0
  %215 = vmatprep.subr.mxu0 0.0
  %216 = vmatpush1.msra.mxu0 0.0
  %217 = vmatprep.subr.mxu0 0.0
  %218 = vmatpush1.msra.mxu0 0.0
  %219 = vmatprep.subr.mxu0 0.0
  %220 = vmatpush1.msra.mxu0 0.0
  %221 = vmatprep.subr.mxu0 0.0
  %222 = vmatpush1.msra.mxu0 0.0
  %223 = vmatprep.subr.mxu0 0.0
  %224 = vmatpush1.msra.mxu0 0.0
  %225 = vmatprep.subr.mxu0 0.0
  %226 = vmatpush1.msra.mxu0 0.0
  %227 = vmatprep.subr.mxu0 0.0
  %228 = vmatpush1.msra.mxu0 0.0
  %229 = vmatprep.subr.mxu0 0.0
  %230 = vmatpush1.msra.mxu0 0.0
  %231 = vmatprep.subr.mxu0 0.0
  %232 = vmatpush1.msra.mxu0 0.0
  %233 = vmatprep.subr.mxu0 0.0
  %234 = vmatpush1.msra.mxu0 0.0
  %235 = vmatprep.subr.mxu0 0.0
  %236 = vmatpush1.msra.mxu0 0.0
  %237 = vmatprep.subr.mxu0 0.0
  %238 = vmatpush1.msra.mxu0 0.0
  %239 = vmatprep.subr.mxu0 0.0
  %240 = vmatpush1.msra.mxu0 0.0
  %241 = vmatprep.subr.mxu0 0.0
  %242 = vmatpush1.msra.mxu0 0.0
  %243 = vmatprep.subr.mxu0 0.0
  %244 = vmatpush1.msra.mxu0 0.0
  %245 = vmatprep.subr.mxu0 0.0
  %246 = vmatpush1.msra.mxu0 0.0
  %247 = vmatprep.subr.mxu0 0.0
  %248 = vmatpush1.msra.mxu0 0.0
  %249 = vmatprep.subr.mxu0 0.0
  %250 = vmatpush1.msra.mxu0 0.0
  %251 = vmatprep.subr.mxu0 0.0
  %252 = vmatpush1.msra.mxu0 0.0
  %253 = vmatprep.subr.mxu0 0.0
  %254 = vmatpush1.msra.mxu0 0.0
  %255 = vmatprep.subr.mxu0 0.0
  %256 = vmatpush1.msra.mxu0 0.0
  %257 = vmatprep.subr.mxu0 0.0
  %258 = vmatpush1.msra.mxu0 0.0
  %259 = vmatprep.mubr.f32.mxu0 0.0
  %260 = vmatmul.mubr.f32.gmra.mrb[0].mxu0 %v190
  %v261 = vpop.f32.mrb[0].mxu0
  %v262 = vadd.f32 0.0, %v261
  %v263 = vpop.f32.mrb[0].mxu0
  %264 = vmatprep.mubr.f32.mxu0 0.0
  %265 = vmatmul.mubr.f32.gmra.mrb[0].mxu0 %v193
  %v266 = vpop.f32.mrb[0].mxu0
  %v267 = vadd.f32 0.0, %v266
  %v268 = vpop.f32.mrb[0].mxu0
  %269 = vdwg.mxu0
  %v270 = vadd.f32 %v184, %v262
  %v271 = vadd.f32 %v185, %v267
  %vm272 = vcmask 261120
  %273 = vst.msk [vmem:[#allocation2] sm:$0xff] %vm272, %v270
  %274 = vst.msk [vmem:[#allocation2 + $0x8] sm:$0xff] %vm272, %v271
  // Predicated region
  $region30: #{gcn_edge_based_forward.4} parent=0 // pred_check
    %p275 = pneg %p23
  $region31: #{gcn_edge_based_forward.4} parent=0 // pred_check_branch
    %277 = sbr.rel (%p275) target = $region33
  $region32: #{gcn_edge_based_forward.4} parent=0 // pred_region
    %v278 = vld [vmem:[#allocation2] sm:$0xff]
    %v279 = vld [vmem:[#allocation2 + $0x8] sm:$0xff]
    %280 = vst.msk [vmem:[%s6] sm:$0xff] %vm272, %v278
    %281 = vst.msk [vmem:[%s6 + $0x8] sm:$0xff] %vm272, %v279
  $region33: #{gcn_edge_based_forward.4} parent=0 // pred_fallthru
    _
  // Predicated region
  $region34: #{gcn_edge_based_forward.4} parent=0 // pred_check
    _
  $region35: #{gcn_edge_based_forward.4} parent=0 // pred_check_branch
    %283 = sbr.rel (0) target = $region37
  $region36: #{gcn_edge_based_forward.4} parent=0 // pred_region
    _
  $region37: #{gcn_edge_based_forward.4} parent=0 // pred_fallthru
    _
  // Predicated region
  $region38: #{gcn_edge_based_forward.4} parent=0 // pred_check
    _
  $region39: #{gcn_edge_based_forward.4} parent=0 // pred_check_branch
    %285 = sbr.rel (0) target = $region41
  $region40: #{gcn_edge_based_forward.4} parent=0 // pred_region
    _
  $region41: #{gcn_edge_based_forward.4} parent=0 // pred_fallthru
    _

// kernel: gcn_edge_based_forward.5
$region0: #{gcn_edge_based_forward.5}
  #allocation0 [shape = 'u32[]', space=smem, size = 0x4, offset = 0x4, fixed_abs, tag = 'smem constant byte address 0x4 - core index']
  #allocation1 [shape = 'u32[144,128]{1,0:T(1,128)}', space=vmem, size = 0x12000, scoped, tag = 'internal scratch']
  %s0 = inlined_call_operand.vmem [shape: f32[64,32], index: 0, kind: input, shape index: {}]
  %s1 = inlined_call_operand.vmem [shape: f32[64,32], index: 1, kind: input, shape index: {}]
  %s2 = inlined_call_operand.vmem [shape: f32[64,8], index: 2, kind: input, shape index: {}]
  %s3 = inlined_call_operand.vmem [shape: f32[32,32], index: 3, kind: input, shape index: {}]
  %s4 = inlined_call_operand.vmem [shape: f32[32,32], index: 4, kind: input, shape index: {}]
  %s5 = inlined_call_operand.vmem [shape: f32[8,32], index: 5, kind: input, shape index: {}]
  %s6 = inlined_call_operand.vmem [shape: f32[1,32], index: 6, kind: input, shape index: {}]
  %s7 = inlined_call_operand.vmem [shape: f32[64,32], index: 7, kind: output, shape index: {}]
  %s8 = sld [smem:[#allocation0]]
  $region38: #{gcn_edge_based_forward.5} parent=0
    _
  %s10 = ssub.s32 1, %s8
  %s11 = scalar_select 0, %s10, %s8
  // Predicated region
  $region2: #{gcn_edge_based_forward.5} parent=0 // pred_check
    _
  $region3: #{gcn_edge_based_forward.5} parent=0 // pred_check_branch
    %13 = sbr.rel (0) target = $region5
  $region4: #{gcn_edge_based_forward.5} parent=0 // pred_region
    _
  $region5: #{gcn_edge_based_forward.5} parent=0 // pred_fallthru
    _
  // Predicated region
  $region6: #{gcn_edge_based_forward.5} parent=0 // pred_check
    _
  $region7: #{gcn_edge_based_forward.5} parent=0 // pred_check_branch
    %15 = sbr.rel (0) target = $region9
  $region8: #{gcn_edge_based_forward.5} parent=0 // pred_region
    _
  $region9: #{gcn_edge_based_forward.5} parent=0 // pred_fallthru
    _
  // Predicated region
  $region10: #{gcn_edge_based_forward.5} parent=0 // pred_check
    _
  $region11: #{gcn_edge_based_forward.5} parent=0 // pred_check_branch
    %17 = sbr.rel (0) target = $region13
  $region12: #{gcn_edge_based_forward.5} parent=0 // pred_region
    _
  $region13: #{gcn_edge_based_forward.5} parent=0 // pred_fallthru
    _
  // Predicated region
  $region14: #{gcn_edge_based_forward.5} parent=0 // pred_check
    _
  $region15: #{gcn_edge_based_forward.5} parent=0 // pred_check_branch
    %19 = sbr.rel (0) target = $region17
  $region16: #{gcn_edge_based_forward.5} parent=0 // pred_region
    _
  $region17: #{gcn_edge_based_forward.5} parent=0 // pred_fallthru
    _
  // Predicated region
  $region18: #{gcn_edge_based_forward.5} parent=0 // pred_check
    _
  $region19: #{gcn_edge_based_forward.5} parent=0 // pred_check_branch
    %21 = sbr.rel (0) target = $region21
  $region20: #{gcn_edge_based_forward.5} parent=0 // pred_region
    _
  $region21: #{gcn_edge_based_forward.5} parent=0 // pred_fallthru
    _
  // Predicated region
  $region22: #{gcn_edge_based_forward.5} parent=0 // pred_check
    _
  $region23: #{gcn_edge_based_forward.5} parent=0 // pred_check_branch
    %23 = sbr.rel (0) target = $region25
  $region24: #{gcn_edge_based_forward.5} parent=0 // pred_region
    _
  $region25: #{gcn_edge_based_forward.5} parent=0 // pred_fallthru
    _
  // Predicated region
  $region26: #{gcn_edge_based_forward.5} parent=0 // pred_check
    _
  $region27: #{gcn_edge_based_forward.5} parent=0 // pred_check_branch
    %25 = sbr.rel (0) target = $region29
  $region28: #{gcn_edge_based_forward.5} parent=0 // pred_region
    _
  $region29: #{gcn_edge_based_forward.5} parent=0 // pred_fallthru
    _
  %v26 = vld [vmem:[%s0] sm:$0xff]
  %v27 = vld [vmem:[%s0 + $0x8] sm:$0xff]
  %v28 = vld [vmem:[%s0 + $0x10] sm:$0xff]
  %v29 = vld [vmem:[%s0 + $0x18] sm:$0xff]
  %v30 = vld [vmem:[%s0 + $0x20] sm:$0xff]
  %v31 = vld [vmem:[%s0 + $0x28] sm:$0xff]
  %v32 = vld [vmem:[%s0 + $0x30] sm:$0xff]
  %v33 = vld [vmem:[%s0 + $0x38] sm:$0xff]
  %v34 = vld [vmem:[%s3] sm:$0xff]
  %v35 = vld [vmem:[%s3 + $0x8] sm:$0xff]
  %v36 = vld [vmem:[%s3 + $0x10] sm:$0xff]
  %v37 = vld [vmem:[%s3 + $0x18] sm:$0xff]
  %v38 = vld [vmem:[%s1] sm:$0xff]
  %v39 = vld [vmem:[%s1 + $0x8] sm:$0xff]
  %v40 = vld [vmem:[%s1 + $0x10] sm:$0xff]
  %v41 = vld [vmem:[%s1 + $0x18] sm:$0xff]
  %v42 = vld [vmem:[%s1 + $0x20] sm:$0xff]
  %v43 = vld [vmem:[%s1 + $0x28] sm:$0xff]
  %v44 = vld [vmem:[%s1 + $0x30] sm:$0xff]
  %v45 = vld [vmem:[%s1 + $0x38] sm:$0xff]
  %v46 = vld [vmem:[%s4] sm:$0xff]
  %v47 = vld [vmem:[%s4 + $0x8] sm:$0xff]
  %v48 = vld [vmem:[%s4 + $0x10] sm:$0xff]
  %v49 = vld [vmem:[%s4 + $0x18] sm:$0xff]
  %vm50 = vcmask 261120
  %v52 = vsel %vm50, %v38, 0
  %v55 = vsel %vm50, %v39, 0
  %v58 = vsel %vm50, %v40, 0
  %v61 = vsel %vm50, %v41, 0
  %v64 = vsel %vm50, %v42, 0
  %v67 = vsel %vm50, %v43, 0
  %v70 = vsel %vm50, %v44, 0
  %v73 = vsel %vm50, %v45, 0
  %75 = vmatprep.subr.mxu0 0.0
  %76 = vmatpush1.msra.mxu0 %v46
  %77 = vmatprep.subr.mxu0 0.0
  %78 = vmatpush1.msra.mxu0 %v47
  %79 = vmatprep.subr.mxu0 0.0
  %80 = vmatpush1.msra.mxu0 %v48
  %81 = vmatprep.subr.mxu0 0.0
  %82 = vmatpush1.msra.mxu0 %v49
  %83 = vmatprep.subr.mxu0 0.0
  %84 = vmatpush1.msra.mxu0 0.0
  %85 = vmatprep.subr.mxu0 0.0
  %86 = vmatpush1.msra.mxu0 0.0
  %87 = vmatprep.subr.mxu0 0.0
  %88 = vmatpush1.msra.mxu0 0.0
  %89 = vmatprep.subr.mxu0 0.0
  %90 = vmatpush1.msra.mxu0 0.0
  %91 = vmatprep.subr.mxu0 0.0
  %92 = vmatpush1.msra.mxu0 0.0
  %93 = vmatprep.subr.mxu0 0.0
  %94 = vmatpush1.msra.mxu0 0.0
  %95 = vmatprep.subr.mxu0 0.0
  %96 = vmatpush1.msra.mxu0 0.0
  %97 = vmatprep.subr.mxu0 0.0
  %98 = vmatpush1.msra.mxu0 0.0
  %99 = vmatprep.subr.mxu0 0.0
  %100 = vmatpush1.msra.mxu0 0.0
  %101 = vmatprep.subr.mxu0 0.0
  %102 = vmatpush1.msra.mxu0 0.0
  %103 = vmatprep.subr.mxu0 0.0
  %104 = vmatpush1.msra.mxu0 0.0
  %105 = vmatprep.subr.mxu0 0.0
  %106 = vmatpush1.msra.mxu0 0.0
  %107 = vmatprep.subr.mxu0 0.0
  %108 = vmatpush1.msra.mxu0 0.0
  %109 = vmatprep.subr.mxu0 0.0
  %110 = vmatpush1.msra.mxu0 0.0
  %111 = vmatprep.subr.mxu0 0.0
  %112 = vmatpush1.msra.mxu0 0.0
  %113 = vmatprep.subr.mxu0 0.0
  %114 = vmatpush1.msra.mxu0 0.0
  %115 = vmatprep.subr.mxu0 0.0
  %116 = vmatpush1.msra.mxu0 0.0
  %117 = vmatprep.subr.mxu0 0.0
  %118 = vmatpush1.msra.mxu0 0.0
  %119 = vmatprep.subr.mxu0 0.0
  %120 = vmatpush1.msra.mxu0 0.0
  %121 = vmatprep.subr.mxu0 0.0
  %122 = vmatpush1.msra.mxu0 0.0
  %123 = vmatprep.subr.mxu0 0.0
  %124 = vmatpush1.msra.mxu0 0.0
  %125 = vmatprep.subr.mxu0 0.0
  %126 = vmatpush1.msra.mxu0 0.0
  %127 = vmatprep.subr.mxu0 0.0
  %128 = vmatpush1.msra.mxu0 0.0
  %129 = vmatprep.subr.mxu0 0.0
  %130 = vmatpush1.msra.mxu0 0.0
  %131 = vmatprep.subr.mxu0 0.0
  %132 = vmatpush1.msra.mxu0 0.0
  %133 = vmatprep.subr.mxu0 0.0
  %134 = vmatpush1.msra.mxu0 0.0
  %135 = vmatprep.subr.mxu0 0.0
  %136 = vmatpush1.msra.mxu0 0.0
  %137 = vmatprep.subr.mxu0 0.0
  %138 = vmatpush1.msra.mxu0 0.0
  %139 = vmatprep.mubr.f32.mxu0 0.0
  %140 = vmatmul.mubr.f32.gmra.mrb[0].mxu0 %v52
  %v141 = vpop.f32.mrb[0].mxu0
  %v142 = vadd.f32 0.0, %v141
  %v143 = vpop.f32.mrb[0].mxu0
  %144 = vmatprep.mubr.f32.mxu0 0.0
  %145 = vmatmul.mubr.f32.gmra.mrb[0].mxu0 %v55
  %v146 = vpop.f32.mrb[0].mxu0
  %v147 = vadd.f32 0.0, %v146
  %v148 = vpop.f32.mrb[0].mxu0
  %149 = vmatprep.mubr.f32.mxu0 0.0
  %150 = vmatmul.mubr.f32.gmra.mrb[0].mxu0 %v58
  %v151 = vpop.f32.mrb[0].mxu0
  %v152 = vadd.f32 0.0, %v151
  %v153 = vpop.f32.mrb[0].mxu0
  %154 = vmatprep.mubr.f32.mxu0 0.0
  %155 = vmatmul.mubr.f32.gmra.mrb[0].mxu0 %v61
  %v156 = vpop.f32.mrb[0].mxu0
  %v157 = vadd.f32 0.0, %v156
  %v158 = vpop.f32.mrb[0].mxu0
  %159 = vmatprep.mubr.f32.mxu0 0.0
  %160 = vmatmul.mubr.f32.gmra.mrb[0].mxu0 %v64
  %v161 = vpop.f32.mrb[0].mxu0
  %v162 = vadd.f32 0.0, %v161
  %v163 = vpop.f32.mrb[0].mxu0
  %164 = vmatprep.mubr.f32.mxu0 0.0
  %165 = vmatmul.mubr.f32.gmra.mrb[0].mxu0 %v67
  %v166 = vpop.f32.mrb[0].mxu0
  %v167 = vadd.f32 0.0, %v166
  %v168 = vpop.f32.mrb[0].mxu0
  %169 = vmatprep.mubr.f32.mxu0 0.0
  %170 = vmatmul.mubr.f32.gmra.mrb[0].mxu0 %v70
  %v171 = vpop.f32.mrb[0].mxu0
  %v172 = vadd.f32 0.0, %v171
  %v173 = vpop.f32.mrb[0].mxu0
  %174 = vmatprep.mubr.f32.mxu0 0.0
  %175 = vmatmul.mubr.f32.gmra.mrb[0].mxu0 %v73
  %v176 = vpop.f32.mrb[0].mxu0
  %v177 = vadd.f32 0.0, %v176
  %v178 = vpop.f32.mrb[0].mxu0
  %179 = vdwg.mxu0
  %v181 = vsel %vm50, %v26, 0
  %v184 = vsel %vm50, %v27, 0
  %v187 = vsel %vm50, %v28, 0
  %v190 = vsel %vm50, %v29, 0
  %v193 = vsel %vm50, %v30, 0
  %v196 = vsel %vm50, %v31, 0
  %v199 = vsel %vm50, %v32, 0
  %v202 = vsel %vm50, %v33, 0
  %204 = vmatprep.subr.mxu0 0.0
  %205 = vmatpush1.msra.mxu0 %v34
  %206 = vmatprep.subr.mxu0 0.0
  %207 = vmatpush1.msra.mxu0 %v35
  %208 = vmatprep.subr.mxu0 0.0
  %209 = vmatpush1.msra.mxu0 %v36
  %210 = vmatprep.subr.mxu0 0.0
  %211 = vmatpush1.msra.mxu0 %v37
  %212 = vmatprep.subr.mxu0 0.0
  %213 = vmatpush1.msra.mxu0 0.0
  %214 = vmatprep.subr.mxu0 0.0
  %215 = vmatpush1.msra.mxu0 0.0
  %216 = vmatprep.subr.mxu0 0.0
  %217 = vmatpush1.msra.mxu0 0.0
  %218 = vmatprep.subr.mxu0 0.0
  %219 = vmatpush1.msra.mxu0 0.0
  %220 = vmatprep.subr.mxu0 0.0
  %221 = vmatpush1.msra.mxu0 0.0
  %222 = vmatprep.subr.mxu0 0.0
  %223 = vmatpush1.msra.mxu0 0.0
  %224 = vmatprep.subr.mxu0 0.0
  %225 = vmatpush1.msra.mxu0 0.0
  %226 = vmatprep.subr.mxu0 0.0
  %227 = vmatpush1.msra.mxu0 0.0
  %228 = vmatprep.subr.mxu0 0.0
  %229 = vmatpush1.msra.mxu0 0.0
  %230 = vmatprep.subr.mxu0 0.0
  %231 = vmatpush1.msra.mxu0 0.0
  %232 = vmatprep.subr.mxu0 0.0
  %233 = vmatpush1.msra.mxu0 0.0
  %234 = vmatprep.subr.mxu0 0.0
  %235 = vmatpush1.msra.mxu0 0.0
  %236 = vmatprep.subr.mxu0 0.0
  %237 = vmatpush1.msra.mxu0 0.0
  %238 = vmatprep.subr.mxu0 0.0
  %239 = vmatpush1.msra.mxu0 0.0
  %240 = vmatprep.subr.mxu0 0.0
  %241 = vmatpush1.msra.mxu0 0.0
  %242 = vmatprep.subr.mxu0 0.0
  %243 = vmatpush1.msra.mxu0 0.0
  %244 = vmatprep.subr.mxu0 0.0
  %245 = vmatpush1.msra.mxu0 0.0
  %246 = vmatprep.subr.mxu0 0.0
  %247 = vmatpush1.msra.mxu0 0.0
  %248 = vmatprep.subr.mxu0 0.0
  %249 = vmatpush1.msra.mxu0 0.0
  %250 = vmatprep.subr.mxu0 0.0
  %251 = vmatpush1.msra.mxu0 0.0
  %252 = vmatprep.subr.mxu0 0.0
  %253 = vmatpush1.msra.mxu0 0.0
  %254 = vmatprep.subr.mxu0 0.0
  %255 = vmatpush1.msra.mxu0 0.0
  %256 = vmatprep.subr.mxu0 0.0
  %257 = vmatpush1.msra.mxu0 0.0
  %258 = vmatprep.subr.mxu0 0.0
  %259 = vmatpush1.msra.mxu0 0.0
  %260 = vmatprep.subr.mxu0 0.0
  %261 = vmatpush1.msra.mxu0 0.0
  %262 = vmatprep.subr.mxu0 0.0
  %263 = vmatpush1.msra.mxu0 0.0
  %264 = vmatprep.subr.mxu0 0.0
  %265 = vmatpush1.msra.mxu0 0.0
  %266 = vmatprep.subr.mxu0 0.0
  %267 = vmatpush1.msra.mxu0 0.0
  %268 = vmatprep.mubr.f32.mxu0 0.0
  %269 = vmatmul.mubr.f32.gmra.mrb[0].mxu0 %v181
  %v270 = vpop.f32.mrb[0].mxu0
  %v271 = vadd.f32 %v142, %v270
  %v272 = vpop.f32.mrb[0].mxu0
  %273 = vmatprep.mubr.f32.mxu0 0.0
  %274 = vmatmul.mubr.f32.gmra.mrb[0].mxu0 %v184
  %v275 = vpop.f32.mrb[0].mxu0
  %v276 = vadd.f32 %v147, %v275
  %v277 = vpop.f32.mrb[0].mxu0
  %278 = vmatprep.mubr.f32.mxu0 0.0
  %279 = vmatmul.mubr.f32.gmra.mrb[0].mxu0 %v187
  %v280 = vpop.f32.mrb[0].mxu0
  %v281 = vadd.f32 %v152, %v280
  %v282 = vpop.f32.mrb[0].mxu0
  %283 = vmatprep.mubr.f32.mxu0 0.0
  %284 = vmatmul.mubr.f32.gmra.mrb[0].mxu0 %v190
  %v285 = vpop.f32.mrb[0].mxu0
  %v286 = vadd.f32 %v157, %v285
  %v287 = vpop.f32.mrb[0].mxu0
  %288 = vmatprep.mubr.f32.mxu0 0.0
  %289 = vmatmul.mubr.f32.gmra.mrb[0].mxu0 %v193
  %v290 = vpop.f32.mrb[0].mxu0
  %v291 = vadd.f32 %v162, %v290
  %v292 = vpop.f32.mrb[0].mxu0
  %293 = vmatprep.mubr.f32.mxu0 0.0
  %294 = vmatmul.mubr.f32.gmra.mrb[0].mxu0 %v196
  %v295 = vpop.f32.mrb[0].mxu0
  %v296 = vadd.f32 %v167, %v295
  %v297 = vpop.f32.mrb[0].mxu0
  %298 = vmatprep.mubr.f32.mxu0 0.0
  %299 = vmatmul.mubr.f32.gmra.mrb[0].mxu0 %v199
  %v300 = vpop.f32.mrb[0].mxu0
  %v301 = vadd.f32 %v172, %v300
  %v302 = vpop.f32.mrb[0].mxu0
  %303 = vmatprep.mubr.f32.mxu0 0.0
  %304 = vmatmul.mubr.f32.gmra.mrb[0].mxu0 %v202
  %v305 = vpop.f32.mrb[0].mxu0
  %v306 = vadd.f32 %v177, %v305
  %v307 = vpop.f32.mrb[0].mxu0
  %308 = vdwg.mxu0
  %v309 = vld [vmem:[%s2] sm:$0xff]
  %v310 = vld [vmem:[%s2 + $0x8] sm:$0xff]
  %v311 = vld [vmem:[%s2 + $0x10] sm:$0xff]
  %v312 = vld [vmem:[%s2 + $0x18] sm:$0xff]
  %v313 = vld [vmem:[%s2 + $0x20] sm:$0xff]
  %v314 = vld [vmem:[%s2 + $0x28] sm:$0xff]
  %v315 = vld [vmem:[%s2 + $0x30] sm:$0xff]
  %v316 = vld [vmem:[%s2 + $0x38] sm:$0xff]
  %v317 = vld [vmem:[%s5] sm:$0xff]
  %vm318 = vcmask 64512
  %v320 = vsel %vm318, %v309, 0
  %v323 = vsel %vm318, %v310, 0
  %v326 = vsel %vm318, %v311, 0
  %v329 = vsel %vm318, %v312, 0
  %v332 = vsel %vm318, %v313, 0
  %v335 = vsel %vm318, %v314, 0
  %v338 = vsel %vm318, %v315, 0
  %v341 = vsel %vm318, %v316, 0
  %343 = vmatprep.subr.mxu0 0.0
  %344 = vmatpush1.msra.mxu0 %v317
  %345 = vmatprep.subr.mxu0 0.0
  %346 = vmatpush1.msra.mxu0 0.0
  %347 = vmatprep.subr.mxu0 0.0
  %348 = vmatpush1.msra.mxu0 0.0
  %349 = vmatprep.subr.mxu0 0.0
  %350 = vmatpush1.msra.mxu0 0.0
  %351 = vmatprep.subr.mxu0 0.0
  %352 = vmatpush1.msra.mxu0 0.0
  %353 = vmatprep.subr.mxu0 0.0
  %354 = vmatpush1.msra.mxu0 0.0
  %355 = vmatprep.subr.mxu0 0.0
  %356 = vmatpush1.msra.mxu0 0.0
  %357 = vmatprep.subr.mxu0 0.0
  %358 = vmatpush1.msra.mxu0 0.0
  %359 = vmatprep.subr.mxu0 0.0
  %360 = vmatpush1.msra.mxu0 0.0
  %361 = vmatprep.subr.mxu0 0.0
  %362 = vmatpush1.msra.mxu0 0.0
  %363 = vmatprep.subr.mxu0 0.0
  %364 = vmatpush1.msra.mxu0 0.0
  %365 = vmatprep.subr.mxu0 0.0
  %366 = vmatpush1.msra.mxu0 0.0
  %367 = vmatprep.subr.mxu0 0.0
  %368 = vmatpush1.msra.mxu0 0.0
  %369 = vmatprep.subr.mxu0 0.0
  %370 = vmatpush1.msra.mxu0 0.0
  %371 = vmatprep.subr.mxu0 0.0
  %372 = vmatpush1.msra.mxu0 0.0
  %373 = vmatprep.subr.mxu0 0.0
  %374 = vmatpush1.msra.mxu0 0.0
  %375 = vmatprep.subr.mxu0 0.0
  %376 = vmatpush1.msra.mxu0 0.0
  %377 = vmatprep.subr.mxu0 0.0
  %378 = vmatpush1.msra.mxu0 0.0
  %379 = vmatprep.subr.mxu0 0.0
  %380 = vmatpush1.msra.mxu0 0.0
  %381 = vmatprep.subr.mxu0 0.0
  %382 = vmatpush1.msra.mxu0 0.0
  %383 = vmatprep.subr.mxu0 0.0
  %384 = vmatpush1.msra.mxu0 0.0
  %385 = vmatprep.subr.mxu0 0.0
  %386 = vmatpush1.msra.mxu0 0.0
  %387 = vmatprep.subr.mxu0 0.0
  %388 = vmatpush1.msra.mxu0 0.0
  %389 = vmatprep.subr.mxu0 0.0
  %390 = vmatpush1.msra.mxu0 0.0
  %391 = vmatprep.subr.mxu0 0.0
  %392 = vmatpush1.msra.mxu0 0.0
  %393 = vmatprep.subr.mxu0 0.0
  %394 = vmatpush1.msra.mxu0 0.0
  %395 = vmatprep.subr.mxu0 0.0
  %396 = vmatpush1.msra.mxu0 0.0
  %397 = vmatprep.subr.mxu0 0.0
  %398 = vmatpush1.msra.mxu0 0.0
  %399 = vmatprep.subr.mxu0 0.0
  %400 = vmatpush1.msra.mxu0 0.0
  %401 = vmatprep.subr.mxu0 0.0
  %402 = vmatpush1.msra.mxu0 0.0
  %403 = vmatprep.subr.mxu0 0.0
  %404 = vmatpush1.msra.mxu0 0.0
  %405 = vmatprep.subr.mxu0 0.0
  %406 = vmatpush1.msra.mxu0 0.0
  %407 = vmatprep.mubr.f32.mxu0 0.0
  %408 = vmatmul.mubr.f32.gmra.mrb[0].mxu0 %v320
  %v409 = vpop.f32.mrb[0].mxu0
  %v410 = vadd.f32 0.0, %v409
  %v411 = vpop.f32.mrb[0].mxu0
  %412 = vmatprep.mubr.f32.mxu0 0.0
  %413 = vmatmul.mubr.f32.gmra.mrb[0].mxu0 %v323
  %v414 = vpop.f32.mrb[0].mxu0
  %v415 = vadd.f32 0.0, %v414
  %v416 = vpop.f32.mrb[0].mxu0
  %417 = vmatprep.mubr.f32.mxu0 0.0
  %418 = vmatmul.mubr.f32.gmra.mrb[0].mxu0 %v326
  %v419 = vpop.f32.mrb[0].mxu0
  %v420 = vadd.f32 0.0, %v419
  %v421 = vpop.f32.mrb[0].mxu0
  %422 = vmatprep.mubr.f32.mxu0 0.0
  %423 = vmatmul.mubr.f32.gmra.mrb[0].mxu0 %v329
  %v424 = vpop.f32.mrb[0].mxu0
  %v425 = vadd.f32 0.0, %v424
  %v426 = vpop.f32.mrb[0].mxu0
  %427 = vmatprep.mubr.f32.mxu0 0.0
  %428 = vmatmul.mubr.f32.gmra.mrb[0].mxu0 %v332
  %v429 = vpop.f32.mrb[0].mxu0
  %v430 = vadd.f32 0.0, %v429
  %v431 = vpop.f32.mrb[0].mxu0
  %432 = vmatprep.mubr.f32.mxu0 0.0
  %433 = vmatmul.mubr.f32.gmra.mrb[0].mxu0 %v335
  %v434 = vpop.f32.mrb[0].mxu0
  %v435 = vadd.f32 0.0, %v434
  %v436 = vpop.f32.mrb[0].mxu0
  %437 = vmatprep.mubr.f32.mxu0 0.0
  %438 = vmatmul.mubr.f32.gmra.mrb[0].mxu0 %v338
  %v439 = vpop.f32.mrb[0].mxu0
  %v440 = vadd.f32 0.0, %v439
  %v441 = vpop.f32.mrb[0].mxu0
  %442 = vmatprep.mubr.f32.mxu0 0.0
  %443 = vmatmul.mubr.f32.gmra.mrb[0].mxu0 %v341
  %v444 = vpop.f32.mrb[0].mxu0
  %v445 = vadd.f32 0.0, %v444
  %v446 = vpop.f32.mrb[0].mxu0
  %447 = vdwg.mxu0
  %v448 = vadd.f32 %v271, %v410
  %v449 = vadd.f32 %v276, %v415
  %v450 = vadd.f32 %v281, %v420
  %v451 = vadd.f32 %v286, %v425
  %v452 = vadd.f32 %v291, %v430
  %v453 = vadd.f32 %v296, %v435
  %v454 = vadd.f32 %v301, %v440
  %v455 = vadd.f32 %v306, %v445
  %v456 = vld [vmem:[%s6] sm:$0x1]
  %v458 = vlaneseq
  %v459 = vshrl.u32 %v458, 7
  %v460 = vsub.s32 0, %v459
  %v461 = vrot.slane %v456, %v460
  %v463 = vadd.f32 %v448, %v461
  %v464 = vadd.f32 %v449, %v461
  %v465 = vadd.f32 %v450, %v461
  %v466 = vadd.f32 %v451, %v461
  %v467 = vadd.f32 %v452, %v461
  %v468 = vadd.f32 %v453, %v461
  %v469 = vadd.f32 %v454, %v461
  %v470 = vadd.f32 %v455, %v461
  %v471 = vmax.f32 %v463, 0.0
  %v472 = vmax.f32 %v464, 0.0
  %v473 = vmax.f32 %v465, 0.0
  %v474 = vmax.f32 %v466, 0.0
  %v475 = vmax.f32 %v467, 0.0
  %v476 = vmax.f32 %v468, 0.0
  %v477 = vmax.f32 %v469, 0.0
  %v478 = vmax.f32 %v470, 0.0
  %479 = vst.msk [vmem:[%s7] sm:$0xff] %vm50, %v471
  %480 = vst.msk [vmem:[%s7 + $0x8] sm:$0xff] %vm50, %v472
  %481 = vst.msk [vmem:[%s7 + $0x10] sm:$0xff] %vm50, %v473
  %482 = vst.msk [vmem:[%s7 + $0x18] sm:$0xff] %vm50, %v474
  %483 = vst.msk [vmem:[%s7 + $0x20] sm:$0xff] %vm50, %v475
  %484 = vst.msk [vmem:[%s7 + $0x28] sm:$0xff] %vm50, %v476
  %485 = vst.msk [vmem:[%s7 + $0x30] sm:$0xff] %vm50, %v477
  %486 = vst.msk [vmem:[%s7 + $0x38] sm:$0xff] %vm50, %v478
  // Predicated region
  $region30: #{gcn_edge_based_forward.5} parent=0 // pred_check
    _
  $region31: #{gcn_edge_based_forward.5} parent=0 // pred_check_branch
    %488 = sbr.rel (0) target = $region33
  $region32: #{gcn_edge_based_forward.5} parent=0 // pred_region
    _
  $region33: #{gcn_edge_based_forward.5} parent=0 // pred_fallthru
    _
  // Predicated region
  $region34: #{gcn_edge_based_forward.5} parent=0 // pred_check
    _
  $region35: #{gcn_edge_based_forward.5} parent=0 // pred_check_branch
    %490 = sbr.rel (0) target = $region37
  $region36: #{gcn_edge_based_forward.5} parent=0 // pred_region
    _
  $region37: #{gcn_edge_based_forward.5} parent=0 // pred_fallthru
    _

// kernel: custom-call
$region0: #{custom-call}
  %s0 = inlined_call_operand.vmem [shape: u32[32], index: 0, kind: output, shape index: {}]

// kernel: gcn_edge_based_forward.6
$region0: #{gcn_edge_based_forward.6}
  #allocation0 [shape = 'u32[]', space=smem, size = 0x4, offset = 0x4, fixed_abs, tag = 'smem constant byte address 0x4 - core index']
  #allocation1 [shape = 'u32[144,128]{1,0:T(1,128)}', space=vmem, size = 0x12000, scoped, tag = 'internal scratch']
  #allocation2 [shape = 'f32[16,32]{1,0:T(8,128)}', space=vmem, size = 0x2000, scoped, tag = 'scratch operand']
  %s0 = inlined_call_operand.vmem [shape: f32[16,64], index: 0, kind: input, shape index: {}]
  %s1 = inlined_call_operand.vmem [shape: f32[64,32], index: 1, kind: input, shape index: {}]
  %s2 = inlined_call_operand.vmem [shape: f32[64,32], index: 2, kind: input, shape index: {}]
  %s3 = inlined_call_operand.vmem [shape: f32[32,32], index: 3, kind: input, shape index: {}]
  %s4 = inlined_call_operand.vmem [shape: f32[32,32], index: 4, kind: input, shape index: {}]
  %s5 = inlined_call_operand.vmem [shape: f32[1,32], index: 5, kind: input, shape index: {}]
  %s6 = inlined_call_operand.vmem [shape: f32[16,32], index: 6, kind: output, shape index: {}]
  %s7 = sld [smem:[#allocation0]]
  $region42: #{gcn_edge_based_forward.6} parent=0
    _
  %s9 = ssub.s32 1, %s7
  %s10 = scalar_select 0, %s9, %s7
  // Predicated region
  $region2: #{gcn_edge_based_forward.6} parent=0 // pred_check
    _
  $region3: #{gcn_edge_based_forward.6} parent=0 // pred_check_branch
    %12 = sbr.rel (0) target = $region5
  $region4: #{gcn_edge_based_forward.6} parent=0 // pred_region
    _
  $region5: #{gcn_edge_based_forward.6} parent=0 // pred_fallthru
    _
  // Predicated region
  $region6: #{gcn_edge_based_forward.6} parent=0 // pred_check
    _
  $region7: #{gcn_edge_based_forward.6} parent=0 // pred_check_branch
    %14 = sbr.rel (0) target = $region9
  $region8: #{gcn_edge_based_forward.6} parent=0 // pred_region
    _
  $region9: #{gcn_edge_based_forward.6} parent=0 // pred_fallthru
    _
  // Predicated region
  $region10: #{gcn_edge_based_forward.6} parent=0 // pred_check
    _
  $region11: #{gcn_edge_based_forward.6} parent=0 // pred_check_branch
    %16 = sbr.rel (0) target = $region13
  $region12: #{gcn_edge_based_forward.6} parent=0 // pred_region
    _
  $region13: #{gcn_edge_based_forward.6} parent=0 // pred_fallthru
    _
  // Predicated region
  $region14: #{gcn_edge_based_forward.6} parent=0 // pred_check
    _
  $region15: #{gcn_edge_based_forward.6} parent=0 // pred_check_branch
    %18 = sbr.rel (0) target = $region17
  $region16: #{gcn_edge_based_forward.6} parent=0 // pred_region
    _
  $region17: #{gcn_edge_based_forward.6} parent=0 // pred_fallthru
    _
  // Predicated region
  $region18: #{gcn_edge_based_forward.6} parent=0 // pred_check
    _
  $region19: #{gcn_edge_based_forward.6} parent=0 // pred_check_branch
    %20 = sbr.rel (0) target = $region21
  $region20: #{gcn_edge_based_forward.6} parent=0 // pred_region
    _
  $region21: #{gcn_edge_based_forward.6} parent=0 // pred_fallthru
    _
  // Predicated region
  $region22: #{gcn_edge_based_forward.6} parent=0 // pred_check
    _
  $region23: #{gcn_edge_based_forward.6} parent=0 // pred_check_branch
    %22 = sbr.rel (0) target = $region25
  $region24: #{gcn_edge_based_forward.6} parent=0 // pred_region
    _
  $region25: #{gcn_edge_based_forward.6} parent=0 // pred_fallthru
    _
  %p23 = scmp.eq.s32.totalorder 0, 0
  // Predicated region
  $region26: #{gcn_edge_based_forward.6} parent=0 // pred_check
    %p24 = pneg %p23
  $region27: #{gcn_edge_based_forward.6} parent=0 // pred_check_branch
    %26 = sbr.rel (%p24) target = $region29
  $region28: #{gcn_edge_based_forward.6} parent=0 // pred_region
    %vm27 = vcmask 261120
    %28 = vst.msk [vmem:[#allocation2] sm:$0xff] %vm27, 0.0
    %29 = vst.msk [vmem:[#allocation2 + $0x8] sm:$0xff] %vm27, 0.0
  $region29: #{gcn_edge_based_forward.6} parent=0 // pred_fallthru
    _
  %v30 = vld [vmem:[%s2] sm:$0xff]
  %v31 = vld [vmem:[%s2 + $0x8] sm:$0xff]
  %v32 = vld [vmem:[%s2 + $0x10] sm:$0xff]
  %v33 = vld [vmem:[%s2 + $0x18] sm:$0xff]
  %v34 = vld [vmem:[%s2 + $0x20] sm:$0xff]
  %v35 = vld [vmem:[%s2 + $0x28] sm:$0xff]
  %v36 = vld [vmem:[%s2 + $0x30] sm:$0xff]
  %v37 = vld [vmem:[%s2 + $0x38] sm:$0xff]
  %v38 = vld [vmem:[%s4] sm:$0xff]
  %v39 = vld [vmem:[%s4 + $0x8] sm:$0xff]
  %v40 = vld [vmem:[%s4 + $0x10] sm:$0xff]
  %v41 = vld [vmem:[%s4 + $0x18] sm:$0xff]
  %v42 = vld [vmem:[%s1] sm:$0xff]
  %v43 = vld [vmem:[%s1 + $0x8] sm:$0xff]
  %v44 = vld [vmem:[%s1 + $0x10] sm:$0xff]
  %v45 = vld [vmem:[%s1 + $0x18] sm:$0xff]
  %v46 = vld [vmem:[%s1 + $0x20] sm:$0xff]
  %v47 = vld [vmem:[%s1 + $0x28] sm:$0xff]
  %v48 = vld [vmem:[%s1 + $0x30] sm:$0xff]
  %v49 = vld [vmem:[%s1 + $0x38] sm:$0xff]
  %v50 = vld [vmem:[%s3] sm:$0xff]
  %v51 = vld [vmem:[%s3 + $0x8] sm:$0xff]
  %v52 = vld [vmem:[%s3 + $0x10] sm:$0xff]
  %v53 = vld [vmem:[%s3 + $0x18] sm:$0xff]
  %vm54 = vcmask 261120
  %v56 = vsel %vm54, %v42, 0
  %v59 = vsel %vm54, %v43, 0
  %v62 = vsel %vm54, %v44, 0
  %v65 = vsel %vm54, %v45, 0
  %v68 = vsel %vm54, %v46, 0
  %v71 = vsel %vm54, %v47, 0
  %v74 = vsel %vm54, %v48, 0
  %v77 = vsel %vm54, %v49, 0
  %79 = vmatprep.subr.mxu0 0.0
  %80 = vmatpush1.msra.mxu0 %v50
  %81 = vmatprep.subr.mxu0 0.0
  %82 = vmatpush1.msra.mxu0 %v51
  %83 = vmatprep.subr.mxu0 0.0
  %84 = vmatpush1.msra.mxu0 %v52
  %85 = vmatprep.subr.mxu0 0.0
  %86 = vmatpush1.msra.mxu0 %v53
  %87 = vmatprep.subr.mxu0 0.0
  %88 = vmatpush1.msra.mxu0 0.0
  %89 = vmatprep.subr.mxu0 0.0
  %90 = vmatpush1.msra.mxu0 0.0
  %91 = vmatprep.subr.mxu0 0.0
  %92 = vmatpush1.msra.mxu0 0.0
  %93 = vmatprep.subr.mxu0 0.0
  %94 = vmatpush1.msra.mxu0 0.0
  %95 = vmatprep.subr.mxu0 0.0
  %96 = vmatpush1.msra.mxu0 0.0
  %97 = vmatprep.subr.mxu0 0.0
  %98 = vmatpush1.msra.mxu0 0.0
  %99 = vmatprep.subr.mxu0 0.0
  %100 = vmatpush1.msra.mxu0 0.0
  %101 = vmatprep.subr.mxu0 0.0
  %102 = vmatpush1.msra.mxu0 0.0
  %103 = vmatprep.subr.mxu0 0.0
  %104 = vmatpush1.msra.mxu0 0.0
  %105 = vmatprep.subr.mxu0 0.0
  %106 = vmatpush1.msra.mxu0 0.0
  %107 = vmatprep.subr.mxu0 0.0
  %108 = vmatpush1.msra.mxu0 0.0
  %109 = vmatprep.subr.mxu0 0.0
  %110 = vmatpush1.msra.mxu0 0.0
  %111 = vmatprep.subr.mxu0 0.0
  %112 = vmatpush1.msra.mxu0 0.0
  %113 = vmatprep.subr.mxu0 0.0
  %114 = vmatpush1.msra.mxu0 0.0
  %115 = vmatprep.subr.mxu0 0.0
  %116 = vmatpush1.msra.mxu0 0.0
  %117 = vmatprep.subr.mxu0 0.0
  %118 = vmatpush1.msra.mxu0 0.0
  %119 = vmatprep.subr.mxu0 0.0
  %120 = vmatpush1.msra.mxu0 0.0
  %121 = vmatprep.subr.mxu0 0.0
  %122 = vmatpush1.msra.mxu0 0.0
  %123 = vmatprep.subr.mxu0 0.0
  %124 = vmatpush1.msra.mxu0 0.0
  %125 = vmatprep.subr.mxu0 0.0
  %126 = vmatpush1.msra.mxu0 0.0
  %127 = vmatprep.subr.mxu0 0.0
  %128 = vmatpush1.msra.mxu0 0.0
  %129 = vmatprep.subr.mxu0 0.0
  %130 = vmatpush1.msra.mxu0 0.0
  %131 = vmatprep.subr.mxu0 0.0
  %132 = vmatpush1.msra.mxu0 0.0
  %133 = vmatprep.subr.mxu0 0.0
  %134 = vmatpush1.msra.mxu0 0.0
  %135 = vmatprep.subr.mxu0 0.0
  %136 = vmatpush1.msra.mxu0 0.0
  %137 = vmatprep.subr.mxu0 0.0
  %138 = vmatpush1.msra.mxu0 0.0
  %139 = vmatprep.subr.mxu0 0.0
  %140 = vmatpush1.msra.mxu0 0.0
  %141 = vmatprep.subr.mxu0 0.0
  %142 = vmatpush1.msra.mxu0 0.0
  %143 = vmatprep.mubr.f32.mxu0 0.0
  %144 = vmatmul.mubr.f32.gmra.mrb[0].mxu0 %v56
  %v145 = vpop.f32.mrb[0].mxu0
  %v146 = vadd.f32 0.0, %v145
  %v147 = vpop.f32.mrb[0].mxu0
  %148 = vmatprep.mubr.f32.mxu0 0.0
  %149 = vmatmul.mubr.f32.gmra.mrb[0].mxu0 %v59
  %v150 = vpop.f32.mrb[0].mxu0
  %v151 = vadd.f32 0.0, %v150
  %v152 = vpop.f32.mrb[0].mxu0
  %153 = vmatprep.mubr.f32.mxu0 0.0
  %154 = vmatmul.mubr.f32.gmra.mrb[0].mxu0 %v62
  %v155 = vpop.f32.mrb[0].mxu0
  %v156 = vadd.f32 0.0, %v155
  %v157 = vpop.f32.mrb[0].mxu0
  %158 = vmatprep.mubr.f32.mxu0 0.0
  %159 = vmatmul.mubr.f32.gmra.mrb[0].mxu0 %v65
  %v160 = vpop.f32.mrb[0].mxu0
  %v161 = vadd.f32 0.0, %v160
  %v162 = vpop.f32.mrb[0].mxu0
  %163 = vmatprep.mubr.f32.mxu0 0.0
  %164 = vmatmul.mubr.f32.gmra.mrb[0].mxu0 %v68
  %v165 = vpop.f32.mrb[0].mxu0
  %v166 = vadd.f32 0.0, %v165
  %v167 = vpop.f32.mrb[0].mxu0
  %168 = vmatprep.mubr.f32.mxu0 0.0
  %169 = vmatmul.mubr.f32.gmra.mrb[0].mxu0 %v71
  %v170 = vpop.f32.mrb[0].mxu0
  %v171 = vadd.f32 0.0, %v170
  %v172 = vpop.f32.mrb[0].mxu0
  %173 = vmatprep.mubr.f32.mxu0 0.0
  %174 = vmatmul.mubr.f32.gmra.mrb[0].mxu0 %v74
  %v175 = vpop.f32.mrb[0].mxu0
  %v176 = vadd.f32 0.0, %v175
  %v177 = vpop.f32.mrb[0].mxu0
  %178 = vmatprep.mubr.f32.mxu0 0.0
  %179 = vmatmul.mubr.f32.gmra.mrb[0].mxu0 %v77
  %v180 = vpop.f32.mrb[0].mxu0
  %v181 = vadd.f32 0.0, %v180
  %v182 = vpop.f32.mrb[0].mxu0
  %183 = vdwg.mxu0
  %v185 = vsel %vm54, %v30, 0
  %v188 = vsel %vm54, %v31, 0
  %v191 = vsel %vm54, %v32, 0
  %v194 = vsel %vm54, %v33, 0
  %v197 = vsel %vm54, %v34, 0
  %v200 = vsel %vm54, %v35, 0
  %v203 = vsel %vm54, %v36, 0
  %v206 = vsel %vm54, %v37, 0
  %208 = vmatprep.subr.mxu0 0.0
  %209 = vmatpush1.msra.mxu0 %v38
  %210 = vmatprep.subr.mxu0 0.0
  %211 = vmatpush1.msra.mxu0 %v39
  %212 = vmatprep.subr.mxu0 0.0
  %213 = vmatpush1.msra.mxu0 %v40
  %214 = vmatprep.subr.mxu0 0.0
  %215 = vmatpush1.msra.mxu0 %v41
  %216 = vmatprep.subr.mxu0 0.0
  %217 = vmatpush1.msra.mxu0 0.0
  %218 = vmatprep.subr.mxu0 0.0
  %219 = vmatpush1.msra.mxu0 0.0
  %220 = vmatprep.subr.mxu0 0.0
  %221 = vmatpush1.msra.mxu0 0.0
  %222 = vmatprep.subr.mxu0 0.0
  %223 = vmatpush1.msra.mxu0 0.0
  %224 = vmatprep.subr.mxu0 0.0
  %225 = vmatpush1.msra.mxu0 0.0
  %226 = vmatprep.subr.mxu0 0.0
  %227 = vmatpush1.msra.mxu0 0.0
  %228 = vmatprep.subr.mxu0 0.0
  %229 = vmatpush1.msra.mxu0 0.0
  %230 = vmatprep.subr.mxu0 0.0
  %231 = vmatpush1.msra.mxu0 0.0
  %232 = vmatprep.subr.mxu0 0.0
  %233 = vmatpush1.msra.mxu0 0.0
  %234 = vmatprep.subr.mxu0 0.0
  %235 = vmatpush1.msra.mxu0 0.0
  %236 = vmatprep.subr.mxu0 0.0
  %237 = vmatpush1.msra.mxu0 0.0
  %238 = vmatprep.subr.mxu0 0.0
  %239 = vmatpush1.msra.mxu0 0.0
  %240 = vmatprep.subr.mxu0 0.0
  %241 = vmatpush1.msra.mxu0 0.0
  %242 = vmatprep.subr.mxu0 0.0
  %243 = vmatpush1.msra.mxu0 0.0
  %244 = vmatprep.subr.mxu0 0.0
  %245 = vmatpush1.msra.mxu0 0.0
  %246 = vmatprep.subr.mxu0 0.0
  %247 = vmatpush1.msra.mxu0 0.0
  %248 = vmatprep.subr.mxu0 0.0
  %249 = vmatpush1.msra.mxu0 0.0
  %250 = vmatprep.subr.mxu0 0.0
  %251 = vmatpush1.msra.mxu0 0.0
  %252 = vmatprep.subr.mxu0 0.0
  %253 = vmatpush1.msra.mxu0 0.0
  %254 = vmatprep.subr.mxu0 0.0
  %255 = vmatpush1.msra.mxu0 0.0
  %256 = vmatprep.subr.mxu0 0.0
  %257 = vmatpush1.msra.mxu0 0.0
  %258 = vmatprep.subr.mxu0 0.0
  %259 = vmatpush1.msra.mxu0 0.0
  %260 = vmatprep.subr.mxu0 0.0
  %261 = vmatpush1.msra.mxu0 0.0
  %262 = vmatprep.subr.mxu0 0.0
  %263 = vmatpush1.msra.mxu0 0.0
  %264 = vmatprep.subr.mxu0 0.0
  %265 = vmatpush1.msra.mxu0 0.0
  %266 = vmatprep.subr.mxu0 0.0
  %267 = vmatpush1.msra.mxu0 0.0
  %268 = vmatprep.subr.mxu0 0.0
  %269 = vmatpush1.msra.mxu0 0.0
  %270 = vmatprep.subr.mxu0 0.0
  %271 = vmatpush1.msra.mxu0 0.0
  %272 = vmatprep.mubr.f32.mxu0 0.0
  %273 = vmatmul.mubr.f32.gmra.mrb[0].mxu0 %v185
  %v274 = vpop.f32.mrb[0].mxu0
  %v275 = vadd.f32 %v146, %v274
  %v276 = vpop.f32.mrb[0].mxu0
  %277 = vmatprep.mubr.f32.mxu0 0.0
  %278 = vmatmul.mubr.f32.gmra.mrb[0].mxu0 %v188
  %v279 = vpop.f32.mrb[0].mxu0
  %v280 = vadd.f32 %v151, %v279
  %v281 = vpop.f32.mrb[0].mxu0
  %282 = vmatprep.mubr.f32.mxu0 0.0
  %283 = vmatmul.mubr.f32.gmra.mrb[0].mxu0 %v191
  %v284 = vpop.f32.mrb[0].mxu0
  %v285 = vadd.f32 %v156, %v284
  %v286 = vpop.f32.mrb[0].mxu0
  %287 = vmatprep.mubr.f32.mxu0 0.0
  %288 = vmatmul.mubr.f32.gmra.mrb[0].mxu0 %v194
  %v289 = vpop.f32.mrb[0].mxu0
  %v290 = vadd.f32 %v161, %v289
  %v291 = vpop.f32.mrb[0].mxu0
  %292 = vmatprep.mubr.f32.mxu0 0.0
  %293 = vmatmul.mubr.f32.gmra.mrb[0].mxu0 %v197
  %v294 = vpop.f32.mrb[0].mxu0
  %v295 = vadd.f32 %v166, %v294
  %v296 = vpop.f32.mrb[0].mxu0
  %297 = vmatprep.mubr.f32.mxu0 0.0
  %298 = vmatmul.mubr.f32.gmra.mrb[0].mxu0 %v200
  %v299 = vpop.f32.mrb[0].mxu0
  %v300 = vadd.f32 %v171, %v299
  %v301 = vpop.f32.mrb[0].mxu0
  %302 = vmatprep.mubr.f32.mxu0 0.0
  %303 = vmatmul.mubr.f32.gmra.mrb[0].mxu0 %v203
  %v304 = vpop.f32.mrb[0].mxu0
  %v305 = vadd.f32 %v176, %v304
  %v306 = vpop.f32.mrb[0].mxu0
  %307 = vmatprep.mubr.f32.mxu0 0.0
  %308 = vmatmul.mubr.f32.gmra.mrb[0].mxu0 %v206
  %v309 = vpop.f32.mrb[0].mxu0
  %v310 = vadd.f32 %v181, %v309
  %v311 = vpop.f32.mrb[0].mxu0
  %312 = vdwg.mxu0
  %v313 = vld [vmem:[%s5] sm:$0x1]
  %v315 = vlaneseq
  %v316 = vshrl.u32 %v315, 7
  %v317 = vsub.s32 0, %v316
  %v318 = vrot.slane %v313, %v317
  %v320 = vadd.f32 %v275, %v318
  %v321 = vadd.f32 %v280, %v318
  %v322 = vadd.f32 %v285, %v318
  %v323 = vadd.f32 %v290, %v318
  %v324 = vadd.f32 %v295, %v318
  %v325 = vadd.f32 %v300, %v318
  %v326 = vadd.f32 %v305, %v318
  %v327 = vadd.f32 %v310, %v318
  %v328 = vmax.f32 %v320, 0.0
  %v329 = vmax.f32 %v321, 0.0
  %v330 = vmax.f32 %v322, 0.0
  %v331 = vmax.f32 %v323, 0.0
  %v332 = vmax.f32 %v324, 0.0
  %v333 = vmax.f32 %v325, 0.0
  %v334 = vmax.f32 %v326, 0.0
  %v335 = vmax.f32 %v327, 0.0
  %v336 = vld [vmem:[#allocation2] sm:$0xff]
  %v337 = vld [vmem:[#allocation2 + $0x8] sm:$0xff]
  %v338 = vld [vmem:[%s0] sm:$0xff]
  %v339 = vld [vmem:[%s0 + $0x8] sm:$0xff]
  %vm340 = vcmask 523264
  %v342 = vsel %vm340, %v338, 0
  %v345 = vsel %vm340, %v339, 0
  %347 = vmatprep.subr.mxu0 0.0
  %348 = vmatpush1.msra.mxu0 %v328
  %349 = vmatprep.subr.mxu0 0.0
  %350 = vmatpush1.msra.mxu0 %v329
  %351 = vmatprep.subr.mxu0 0.0
  %352 = vmatpush1.msra.mxu0 %v330
  %353 = vmatprep.subr.mxu0 0.0
  %354 = vmatpush1.msra.mxu0 %v331
  %355 = vmatprep.subr.mxu0 0.0
  %356 = vmatpush1.msra.mxu0 %v332
  %357 = vmatprep.subr.mxu0 0.0
  %358 = vmatpush1.msra.mxu0 %v333
  %359 = vmatprep.subr.mxu0 0.0
  %360 = vmatpush1.msra.mxu0 %v334
  %361 = vmatprep.subr.mxu0 0.0
  %362 = vmatpush1.msra.mxu0 %v335
  %363 = vmatprep.subr.mxu0 0.0
  %364 = vmatpush1.msra.mxu0 0.0
  %365 = vmatprep.subr.mxu0 0.0
  %366 = vmatpush1.msra.mxu0 0.0
  %367 = vmatprep.subr.mxu0 0.0
  %368 = vmatpush1.msra.mxu0 0.0
  %369 = vmatprep.subr.mxu0 0.0
  %370 = vmatpush1.msra.mxu0 0.0
  %371 = vmatprep.subr.mxu0 0.0
  %372 = vmatpush1.msra.mxu0 0.0
  %373 = vmatprep.subr.mxu0 0.0
  %374 = vmatpush1.msra.mxu0 0.0
  %375 = vmatprep.subr.mxu0 0.0
  %376 = vmatpush1.msra.mxu0 0.0
  %377 = vmatprep.subr.mxu0 0.0
  %378 = vmatpush1.msra.mxu0 0.0
  %379 = vmatprep.subr.mxu0 0.0
  %380 = vmatpush1.msra.mxu0 0.0
  %381 = vmatprep.subr.mxu0 0.0
  %382 = vmatpush1.msra.mxu0 0.0
  %383 = vmatprep.subr.mxu0 0.0
  %384 = vmatpush1.msra.mxu0 0.0
  %385 = vmatprep.subr.mxu0 0.0
  %386 = vmatpush1.msra.mxu0 0.0
  %387 = vmatprep.subr.mxu0 0.0
  %388 = vmatpush1.msra.mxu0 0.0
  %389 = vmatprep.subr.mxu0 0.0
  %390 = vmatpush1.msra.mxu0 0.0
  %391 = vmatprep.subr.mxu0 0.0
  %392 = vmatpush1.msra.mxu0 0.0
  %393 = vmatprep.subr.mxu0 0.0
  %394 = vmatpush1.msra.mxu0 0.0
  %395 = vmatprep.subr.mxu0 0.0
  %396 = vmatpush1.msra.mxu0 0.0
  %397 = vmatprep.subr.mxu0 0.0
  %398 = vmatpush1.msra.mxu0 0.0
  %399 = vmatprep.subr.mxu0 0.0
  %400 = vmatpush1.msra.mxu0 0.0
  %401 = vmatprep.subr.mxu0 0.0
  %402 = vmatpush1.msra.mxu0 0.0
  %403 = vmatprep.subr.mxu0 0.0
  %404 = vmatpush1.msra.mxu0 0.0
  %405 = vmatprep.subr.mxu0 0.0
  %406 = vmatpush1.msra.mxu0 0.0
  %407 = vmatprep.subr.mxu0 0.0
  %408 = vmatpush1.msra.mxu0 0.0
  %409 = vmatprep.subr.mxu0 0.0
  %410 = vmatpush1.msra.mxu0 0.0
  %411 = vmatprep.mubr.f32.mxu0 0.0
  %412 = vmatmul.mubr.f32.gmra.mrb[0].mxu0 %v342
  %v413 = vpop.f32.mrb[0].mxu0
  %v414 = vadd.f32 0.0, %v413
  %v415 = vpop.f32.mrb[0].mxu0
  %416 = vmatprep.mubr.f32.mxu0 0.0
  %417 = vmatmul.mubr.f32.gmra.mrb[0].mxu0 %v345
  %v418 = vpop.f32.mrb[0].mxu0
  %v419 = vadd.f32 0.0, %v418
  %v420 = vpop.f32.mrb[0].mxu0
  %421 = vdwg.mxu0
  %v422 = vadd.f32 %v336, %v414
  %v423 = vadd.f32 %v337, %v419
  %424 = vst.msk [vmem:[#allocation2] sm:$0xff] %vm54, %v422
  %425 = vst.msk [vmem:[#allocation2 + $0x8] sm:$0xff] %vm54, %v423
  // Predicated region
  $region30: #{gcn_edge_based_forward.6} parent=0 // pred_check
    %p426 = pneg %p23
  $region31: #{gcn_edge_based_forward.6} parent=0 // pred_check_branch
    %428 = sbr.rel (%p426) target = $region33
  $region32: #{gcn_edge_based_forward.6} parent=0 // pred_region
    %v429 = vld [vmem:[#allocation2] sm:$0xff]
    %v430 = vld [vmem:[#allocation2 + $0x8] sm:$0xff]
    %431 = vst.msk [vmem:[%s6] sm:$0xff] %vm54, %v429
    %432 = vst.msk [vmem:[%s6 + $0x8] sm:$0xff] %vm54, %v430
  $region33: #{gcn_edge_based_forward.6} parent=0 // pred_fallthru
    _
  // Predicated region
  $region34: #{gcn_edge_based_forward.6} parent=0 // pred_check
    _
  $region35: #{gcn_edge_based_forward.6} parent=0 // pred_check_branch
    %434 = sbr.rel (0) target = $region37
  $region36: #{gcn_edge_based_forward.6} parent=0 // pred_region
    _
  $region37: #{gcn_edge_based_forward.6} parent=0 // pred_fallthru
    _
  // Predicated region
  $region38: #{gcn_edge_based_forward.6} parent=0 // pred_check
    _
  $region39: #{gcn_edge_based_forward.6} parent=0 // pred_check_branch
    %436 = sbr.rel (0) target = $region41
  $region40: #{gcn_edge_based_forward.6} parent=0 // pred_region
    _
  $region41: #{gcn_edge_based_forward.6} parent=0 // pred_fallthru
    _

// kernel: gcn_edge_based_forward.7
$region0: #{gcn_edge_based_forward.7}
  #allocation0 [shape = 'u32[]', space=smem, size = 0x4, offset = 0x4, fixed_abs, tag = 'smem constant byte address 0x4 - core index']
  #allocation1 [shape = 'u32[144,128]{1,0:T(1,128)}', space=vmem, size = 0x12000, scoped, tag = 'internal scratch']
  #allocation2 [shape = 'f32[1,1]{1,0:T(1,128)}', space=vmem, size = 0x200, scoped, tag = 'scratch operand']
  #allocation3 [shape = 'f32[1,1]{1,0:T(1,128)}', space=vmem, size = 0x200, scoped, tag = 'scratch operand']
  #allocation4 [shape = 'f32[1,1]{1,0:T(1,128)}', space=vmem, size = 0x200, scoped, tag = 'scratch operand']
  #allocation5 [shape = 'f32[1,1]{1,0:T(1,128)}', space=vmem, size = 0x200, scoped, tag = 'scratch operand']
  #allocation6 [shape = 'f32[1,1]{1,0:T(1,128)}', space=vmem, size = 0x200, scoped, tag = 'scratch operand']
  #allocation7 [shape = 'f32[1,1]{1,0:T(1,128)S(1)}', space=vmem, size = 0x200, scoped, tag = 'scoped memory for gcn_edge_based_forward.7']
  %s0 = inlined_call_operand.vmem [shape: f32[32,32], index: 0, kind: input, shape index: {}]
  %s1 = inlined_call_operand.vmem [shape: f32[32,32], index: 1, kind: input, shape index: {}]
  %s2 = inlined_call_operand.vmem [shape: f32[32,32], index: 2, kind: input, shape index: {}]
  %s3 = inlined_call_operand.vmem [shape: f32[32,32], index: 3, kind: input, shape index: {}]
  %s4 = inlined_call_operand.vmem [shape: f32[32,32], index: 4, kind: input, shape index: {}]
  %s5 = inlined_call_operand.vmem [shape: f32[32,32], index: 5, kind: input, shape index: {}]
  %s6 = inlined_call_operand.vmem [shape: f32[32,1], index: 6, kind: input, shape index: {}]
  %s7 = inlined_call_operand.vmem [shape: f32[1,32], index: 7, kind: input, shape index: {}]
  %s8 = inlined_call_operand.<no memory space> [shape: f32[1,1], index: 8, kind: input, shape index: {}]
  %s9 = inlined_call_operand.vmem [shape: f32[1,32], index: 9, kind: input, shape index: {}]
  %s10 = inlined_call_operand.hbm [shape: f32[1,32], index: 10, kind: output, shape index: {0}]
  %s11 = inlined_call_operand.hbm [shape: f32[1,1], index: 11, kind: output, shape index: {1}]
  %12 = xla_tuple %s10, %s11
  %s13 = sld [smem:[#allocation0]]
  $region66: #{gcn_edge_based_forward.7} parent=0
    _
  %s15 = ssub.s32 1, %s13
  %s16 = scalar_select 0, %s15, %s13
  %v17 = vstv %s8
  %18 = vst [vmem:[#allocation7] sm:$0x1] %v17
  $region1: #{gcn_edge_based_forward.7} parent=0
    #allocation8 [shape = 'u8[512]{0}', space=vmem, size = 0x400, scoped, tag = 'output window, operand 0, single buffered']
    #allocation9 [shape = 's32[1]{0}', space=sflag, size = 0x4, scoped, tag = 'scoped memory for gcn_edge_based_forward.7']
    #allocation10 [shape = 'u8[512]{0}', space=vmem, size = 0x400, scoped, tag = 'output window, operand 1, single buffered']
    #allocation11 [shape = 's32[1]{0}', space=sflag, size = 0x4, scoped, tag = 'scoped memory for gcn_edge_based_forward.7']
    %19 = vsyncpa [#allocation9], 0
    %20 = vsyncpa [#allocation11], 0
    // Predicated region
    $region2: #{gcn_edge_based_forward.7} parent=1 // pred_check
      _
    $region3: #{gcn_edge_based_forward.7} parent=1 // pred_check_branch
      %22 = sbr.rel (0) target = $region5
    $region4: #{gcn_edge_based_forward.7} parent=1 // pred_region
      _
    $region5: #{gcn_edge_based_forward.7} parent=1 // pred_fallthru
      _
    // Predicated region
    $region6: #{gcn_edge_based_forward.7} parent=1 // pred_check
      _
    $region7: #{gcn_edge_based_forward.7} parent=1 // pred_check_branch
      %24 = sbr.rel (0) target = $region9
    $region8: #{gcn_edge_based_forward.7} parent=1 // pred_region
      _
    $region9: #{gcn_edge_based_forward.7} parent=1 // pred_fallthru
      _
    // Predicated region
    $region10: #{gcn_edge_based_forward.7} parent=1 // pred_check
      _
    $region11: #{gcn_edge_based_forward.7} parent=1 // pred_check_branch
      %26 = sbr.rel (0) target = $region13
    $region12: #{gcn_edge_based_forward.7} parent=1 // pred_region
      _
    $region13: #{gcn_edge_based_forward.7} parent=1 // pred_fallthru
      _
    // Predicated region
    $region14: #{gcn_edge_based_forward.7} parent=1 // pred_check
      _
    $region15: #{gcn_edge_based_forward.7} parent=1 // pred_check_branch
      %28 = sbr.rel (0) target = $region17
    $region16: #{gcn_edge_based_forward.7} parent=1 // pred_region
      _
    $region17: #{gcn_edge_based_forward.7} parent=1 // pred_fallthru
      _
    // Predicated region
    $region18: #{gcn_edge_based_forward.7} parent=1 // pred_check
      _
    $region19: #{gcn_edge_based_forward.7} parent=1 // pred_check_branch
      %30 = sbr.rel (0) target = $region21
    $region20: #{gcn_edge_based_forward.7} parent=1 // pred_region
      _
    $region21: #{gcn_edge_based_forward.7} parent=1 // pred_fallthru
      _
    // Predicated region
    $region22: #{gcn_edge_based_forward.7} parent=1 // pred_check
      _
    $region23: #{gcn_edge_based_forward.7} parent=1 // pred_check_branch
      %32 = sbr.rel (0) target = $region25
    $region24: #{gcn_edge_based_forward.7} parent=1 // pred_region
      _
    $region25: #{gcn_edge_based_forward.7} parent=1 // pred_fallthru
      _
    // Predicated region
    $region26: #{gcn_edge_based_forward.7} parent=1 // pred_check
      _
    $region27: #{gcn_edge_based_forward.7} parent=1 // pred_check_branch
      %34 = sbr.rel (0) target = $region29
    $region28: #{gcn_edge_based_forward.7} parent=1 // pred_region
      _
    $region29: #{gcn_edge_based_forward.7} parent=1 // pred_fallthru
      _
    // Predicated region
    $region30: #{gcn_edge_based_forward.7} parent=1 // pred_check
      _
    $region31: #{gcn_edge_based_forward.7} parent=1 // pred_check_branch
      %36 = sbr.rel (0) target = $region33
    $region32: #{gcn_edge_based_forward.7} parent=1 // pred_region
      _
    $region33: #{gcn_edge_based_forward.7} parent=1 // pred_fallthru
      _
    // Predicated region
    $region34: #{gcn_edge_based_forward.7} parent=1 // pred_check
      _
    $region35: #{gcn_edge_based_forward.7} parent=1 // pred_check_branch
      %38 = sbr.rel (0) target = $region37
    $region36: #{gcn_edge_based_forward.7} parent=1 // pred_region
      _
    $region37: #{gcn_edge_based_forward.7} parent=1 // pred_fallthru
      _
    // Predicated region
    $region38: #{gcn_edge_based_forward.7} parent=1 // pred_check
      _
    $region39: #{gcn_edge_based_forward.7} parent=1 // pred_check_branch
      %40 = sbr.rel (0) target = $region41
    $region40: #{gcn_edge_based_forward.7} parent=1 // pred_region
      _
    $region41: #{gcn_edge_based_forward.7} parent=1 // pred_fallthru
      _
    %p41 = scmp.eq.s32.totalorder 0, 0
    // Predicated region
    $region42: #{gcn_edge_based_forward.7} parent=1 // pred_check
      %p42 = pneg %p41
    $region43: #{gcn_edge_based_forward.7} parent=1 // pred_check_branch
      %44 = sbr.rel (%p42) target = $region45
    $region44: #{gcn_edge_based_forward.7} parent=1 // pred_region
      %vm45 = vcmask 0
      %46 = vst.msk [vmem:[#allocation2] sm:$0x1] %vm45, 0.0
      %47 = vst.msk [vmem:[#allocation3] sm:$0x1] %vm45, 0.0
      %48 = vst.msk [vmem:[#allocation4] sm:$0x1] %vm45, 0.0
      %49 = vst.msk [vmem:[#allocation5] sm:$0x1] %vm45, 0.0
      %50 = vst.msk [vmem:[#allocation6] sm:$0x1] %vm45, 0.0
    $region45: #{gcn_edge_based_forward.7} parent=1 // pred_fallthru
      _
    %v51 = vld [vmem:[%s3] sm:$0xff]
    %v52 = vld [vmem:[%s3 + $0x8] sm:$0xff]
    %v53 = vld [vmem:[%s3 + $0x10] sm:$0xff]
    %v54 = vld [vmem:[%s3 + $0x18] sm:$0xff]
    %v55 = vld [vmem:[%s0] sm:$0xff]
    %v56 = vld [vmem:[%s0 + $0x8] sm:$0xff]
    %v57 = vld [vmem:[%s0 + $0x10] sm:$0xff]
    %v58 = vld [vmem:[%s0 + $0x18] sm:$0xff]
    %v59 = vld [vmem:[%s4] sm:$0xff]
    %v60 = vld [vmem:[%s4 + $0x8] sm:$0xff]
    %v61 = vld [vmem:[%s4 + $0x10] sm:$0xff]
    %v62 = vld [vmem:[%s4 + $0x18] sm:$0xff]
    %v63 = vld [vmem:[%s1] sm:$0xff]
    %v64 = vld [vmem:[%s1 + $0x8] sm:$0xff]
    %v65 = vld [vmem:[%s1 + $0x10] sm:$0xff]
    %v66 = vld [vmem:[%s1 + $0x18] sm:$0xff]
    %vm67 = vcmask 261120
    %v69 = vsel %vm67, %v59, 0
    %v72 = vsel %vm67, %v60, 0
    %v75 = vsel %vm67, %v61, 0
    %v78 = vsel %vm67, %v62, 0
    %80 = vmatprep.subr.mxu0 0.0
    %81 = vmatpush1.msra.mxu0 %v63
    %82 = vmatprep.subr.mxu0 0.0
    %83 = vmatpush1.msra.mxu0 %v64
    %84 = vmatprep.subr.mxu0 0.0
    %85 = vmatpush1.msra.mxu0 %v65
    %86 = vmatprep.subr.mxu0 0.0
    %87 = vmatpush1.msra.mxu0 %v66
    %88 = vmatprep.subr.mxu0 0.0
    %89 = vmatpush1.msra.mxu0 0.0
    %90 = vmatprep.subr.mxu0 0.0
    %91 = vmatpush1.msra.mxu0 0.0
    %92 = vmatprep.subr.mxu0 0.0
    %93 = vmatpush1.msra.mxu0 0.0
    %94 = vmatprep.subr.mxu0 0.0
    %95 = vmatpush1.msra.mxu0 0.0
    %96 = vmatprep.subr.mxu0 0.0
    %97 = vmatpush1.msra.mxu0 0.0
    %98 = vmatprep.subr.mxu0 0.0
    %99 = vmatpush1.msra.mxu0 0.0
    %100 = vmatprep.subr.mxu0 0.0
    %101 = vmatpush1.msra.mxu0 0.0
    %102 = vmatprep.subr.mxu0 0.0
    %103 = vmatpush1.msra.mxu0 0.0
    %104 = vmatprep.subr.mxu0 0.0
    %105 = vmatpush1.msra.mxu0 0.0
    %106 = vmatprep.subr.mxu0 0.0
    %107 = vmatpush1.msra.mxu0 0.0
    %108 = vmatprep.subr.mxu0 0.0
    %109 = vmatpush1.msra.mxu0 0.0
    %110 = vmatprep.subr.mxu0 0.0
    %111 = vmatpush1.msra.mxu0 0.0
    %112 = vmatprep.subr.mxu0 0.0
    %113 = vmatpush1.msra.mxu0 0.0
    %114 = vmatprep.subr.mxu0 0.0
    %115 = vmatpush1.msra.mxu0 0.0
    %116 = vmatprep.subr.mxu0 0.0
    %117 = vmatpush1.msra.mxu0 0.0
    %118 = vmatprep.subr.mxu0 0.0
    %119 = vmatpush1.msra.mxu0 0.0
    %120 = vmatprep.subr.mxu0 0.0
    %121 = vmatpush1.msra.mxu0 0.0
    %122 = vmatprep.subr.mxu0 0.0
    %123 = vmatpush1.msra.mxu0 0.0
    %124 = vmatprep.subr.mxu0 0.0
    %125 = vmatpush1.msra.mxu0 0.0
    %126 = vmatprep.subr.mxu0 0.0
    %127 = vmatpush1.msra.mxu0 0.0
    %128 = vmatprep.subr.mxu0 0.0
    %129 = vmatpush1.msra.mxu0 0.0
    %130 = vmatprep.subr.mxu0 0.0
    %131 = vmatpush1.msra.mxu0 0.0
    %132 = vmatprep.subr.mxu0 0.0
    %133 = vmatpush1.msra.mxu0 0.0
    %134 = vmatprep.subr.mxu0 0.0
    %135 = vmatpush1.msra.mxu0 0.0
    %136 = vmatprep.subr.mxu0 0.0
    %137 = vmatpush1.msra.mxu0 0.0
    %138 = vmatprep.subr.mxu0 0.0
    %139 = vmatpush1.msra.mxu0 0.0
    %140 = vmatprep.subr.mxu0 0.0
    %141 = vmatpush1.msra.mxu0 0.0
    %142 = vmatprep.subr.mxu0 0.0
    %143 = vmatpush1.msra.mxu0 0.0
    %144 = vmatprep.mubr.f32.mxu0 0.0
    %145 = vmatmul.mubr.f32.gmra.mrb[0].mxu0 %v69
    %v146 = vpop.f32.mrb[0].mxu0
    %v147 = vadd.f32 0.0, %v146
    %v148 = vpop.f32.mrb[0].mxu0
    %149 = vmatprep.mubr.f32.mxu0 0.0
    %150 = vmatmul.mubr.f32.gmra.mrb[0].mxu0 %v72
    %v151 = vpop.f32.mrb[0].mxu0
    %v152 = vadd.f32 0.0, %v151
    %v153 = vpop.f32.mrb[0].mxu0
    %154 = vmatprep.mubr.f32.mxu0 0.0
    %155 = vmatmul.mubr.f32.gmra.mrb[0].mxu0 %v75
    %v156 = vpop.f32.mrb[0].mxu0
    %v157 = vadd.f32 0.0, %v156
    %v158 = vpop.f32.mrb[0].mxu0
    %159 = vmatprep.mubr.f32.mxu0 0.0
    %160 = vmatmul.mubr.f32.gmra.mrb[0].mxu0 %v78
    %v161 = vpop.f32.mrb[0].mxu0
    %v162 = vadd.f32 0.0, %v161
    %v163 = vpop.f32.mrb[0].mxu0
    %164 = vdwg.mxu0
    %v166 = vsel %vm67, %v51, 0
    %v169 = vsel %vm67, %v52, 0
    %v172 = vsel %vm67, %v53, 0
    %v175 = vsel %vm67, %v54, 0
    %177 = vmatprep.subr.mxu0 0.0
    %178 = vmatpush1.msra.mxu0 %v55
    %179 = vmatprep.subr.mxu0 0.0
    %180 = vmatpush1.msra.mxu0 %v56
    %181 = vmatprep.subr.mxu0 0.0
    %182 = vmatpush1.msra.mxu0 %v57
    %183 = vmatprep.subr.mxu0 0.0
    %184 = vmatpush1.msra.mxu0 %v58
    %185 = vmatprep.subr.mxu0 0.0
    %186 = vmatpush1.msra.mxu0 0.0
    %187 = vmatprep.subr.mxu0 0.0
    %188 = vmatpush1.msra.mxu0 0.0
    %189 = vmatprep.subr.mxu0 0.0
    %190 = vmatpush1.msra.mxu0 0.0
    %191 = vmatprep.subr.mxu0 0.0
    %192 = vmatpush1.msra.mxu0 0.0
    %193 = vmatprep.subr.mxu0 0.0
    %194 = vmatpush1.msra.mxu0 0.0
    %195 = vmatprep.subr.mxu0 0.0
    %196 = vmatpush1.msra.mxu0 0.0
    %197 = vmatprep.subr.mxu0 0.0
    %198 = vmatpush1.msra.mxu0 0.0
    %199 = vmatprep.subr.mxu0 0.0
    %200 = vmatpush1.msra.mxu0 0.0
    %201 = vmatprep.subr.mxu0 0.0
    %202 = vmatpush1.msra.mxu0 0.0
    %203 = vmatprep.subr.mxu0 0.0
    %204 = vmatpush1.msra.mxu0 0.0
    %205 = vmatprep.subr.mxu0 0.0
    %206 = vmatpush1.msra.mxu0 0.0
    %207 = vmatprep.subr.mxu0 0.0
    %208 = vmatpush1.msra.mxu0 0.0
    %209 = vmatprep.subr.mxu0 0.0
    %210 = vmatpush1.msra.mxu0 0.0
    %211 = vmatprep.subr.mxu0 0.0
    %212 = vmatpush1.msra.mxu0 0.0
    %213 = vmatprep.subr.mxu0 0.0
    %214 = vmatpush1.msra.mxu0 0.0
    %215 = vmatprep.subr.mxu0 0.0
    %216 = vmatpush1.msra.mxu0 0.0
    %217 = vmatprep.subr.mxu0 0.0
    %218 = vmatpush1.msra.mxu0 0.0
    %219 = vmatprep.subr.mxu0 0.0
    %220 = vmatpush1.msra.mxu0 0.0
    %221 = vmatprep.subr.mxu0 0.0
    %222 = vmatpush1.msra.mxu0 0.0
    %223 = vmatprep.subr.mxu0 0.0
    %224 = vmatpush1.msra.mxu0 0.0
    %225 = vmatprep.subr.mxu0 0.0
    %226 = vmatpush1.msra.mxu0 0.0
    %227 = vmatprep.subr.mxu0 0.0
    %228 = vmatpush1.msra.mxu0 0.0
    %229 = vmatprep.subr.mxu0 0.0
    %230 = vmatpush1.msra.mxu0 0.0
    %231 = vmatprep.subr.mxu0 0.0
    %232 = vmatpush1.msra.mxu0 0.0
    %233 = vmatprep.subr.mxu0 0.0
    %234 = vmatpush1.msra.mxu0 0.0
    %235 = vmatprep.subr.mxu0 0.0
    %236 = vmatpush1.msra.mxu0 0.0
    %237 = vmatprep.subr.mxu0 0.0
    %238 = vmatpush1.msra.mxu0 0.0
    %239 = vmatprep.subr.mxu0 0.0
    %240 = vmatpush1.msra.mxu0 0.0
    %241 = vmatprep.mubr.f32.mxu0 0.0
    %242 = vmatmul.mubr.f32.gmra.mrb[0].mxu0 %v166
    %v243 = vpop.f32.mrb[0].mxu0
    %v244 = vadd.f32 %v147, %v243
    %v245 = vpop.f32.mrb[0].mxu0
    %246 = vmatprep.mubr.f32.mxu0 0.0
    %247 = vmatmul.mubr.f32.gmra.mrb[0].mxu0 %v169
    %v248 = vpop.f32.mrb[0].mxu0
    %v249 = vadd.f32 %v152, %v248
    %v250 = vpop.f32.mrb[0].mxu0
    %251 = vmatprep.mubr.f32.mxu0 0.0
    %252 = vmatmul.mubr.f32.gmra.mrb[0].mxu0 %v172
    %v253 = vpop.f32.mrb[0].mxu0
    %v254 = vadd.f32 %v157, %v253
    %v255 = vpop.f32.mrb[0].mxu0
    %256 = vmatprep.mubr.f32.mxu0 0.0
    %257 = vmatmul.mubr.f32.gmra.mrb[0].mxu0 %v175
    %v258 = vpop.f32.mrb[0].mxu0
    %v259 = vadd.f32 %v162, %v258
    %v260 = vpop.f32.mrb[0].mxu0
    %261 = vdwg.mxu0
    %v262 = vld [vmem:[%s5] sm:$0xff]
    %v263 = vld [vmem:[%s5 + $0x8] sm:$0xff]
    %v264 = vld [vmem:[%s5 + $0x10] sm:$0xff]
    %v265 = vld [vmem:[%s5 + $0x18] sm:$0xff]
    %v266 = vld [vmem:[%s2] sm:$0xff]
    %v267 = vld [vmem:[%s2 + $0x8] sm:$0xff]
    %v268 = vld [vmem:[%s2 + $0x10] sm:$0xff]
    %v269 = vld [vmem:[%s2 + $0x18] sm:$0xff]
    %v271 = vsel %vm67, %v262, 0
    %v274 = vsel %vm67, %v263, 0
    %v277 = vsel %vm67, %v264, 0
    %v280 = vsel %vm67, %v265, 0
    %282 = vmatprep.subr.mxu0 0.0
    %283 = vmatpush1.msra.mxu0 %v266
    %284 = vmatprep.subr.mxu0 0.0
    %285 = vmatpush1.msra.mxu0 %v267
    %286 = vmatprep.subr.mxu0 0.0
    %287 = vmatpush1.msra.mxu0 %v268
    %288 = vmatprep.subr.mxu0 0.0
    %289 = vmatpush1.msra.mxu0 %v269
    %290 = vmatprep.subr.mxu0 0.0
    %291 = vmatpush1.msra.mxu0 0.0
    %292 = vmatprep.subr.mxu0 0.0
    %293 = vmatpush1.msra.mxu0 0.0
    %294 = vmatprep.subr.mxu0 0.0
    %295 = vmatpush1.msra.mxu0 0.0
    %296 = vmatprep.subr.mxu0 0.0
    %297 = vmatpush1.msra.mxu0 0.0
    %298 = vmatprep.subr.mxu0 0.0
    %299 = vmatpush1.msra.mxu0 0.0
    %300 = vmatprep.subr.mxu0 0.0
    %301 = vmatpush1.msra.mxu0 0.0
    %302 = vmatprep.subr.mxu0 0.0
    %303 = vmatpush1.msra.mxu0 0.0
    %304 = vmatprep.subr.mxu0 0.0
    %305 = vmatpush1.msra.mxu0 0.0
    %306 = vmatprep.subr.mxu0 0.0
    %307 = vmatpush1.msra.mxu0 0.0
    %308 = vmatprep.subr.mxu0 0.0
    %309 = vmatpush1.msra.mxu0 0.0
    %310 = vmatprep.subr.mxu0 0.0
    %311 = vmatpush1.msra.mxu0 0.0
    %312 = vmatprep.subr.mxu0 0.0
    %313 = vmatpush1.msra.mxu0 0.0
    %314 = vmatprep.subr.mxu0 0.0
    %315 = vmatpush1.msra.mxu0 0.0
    %316 = vmatprep.subr.mxu0 0.0
    %317 = vmatpush1.msra.mxu0 0.0
    %318 = vmatprep.subr.mxu0 0.0
    %319 = vmatpush1.msra.mxu0 0.0
    %320 = vmatprep.subr.mxu0 0.0
    %321 = vmatpush1.msra.mxu0 0.0
    %322 = vmatprep.subr.mxu0 0.0
    %323 = vmatpush1.msra.mxu0 0.0
    %324 = vmatprep.subr.mxu0 0.0
    %325 = vmatpush1.msra.mxu0 0.0
    %326 = vmatprep.subr.mxu0 0.0
    %327 = vmatpush1.msra.mxu0 0.0
    %328 = vmatprep.subr.mxu0 0.0
    %329 = vmatpush1.msra.mxu0 0.0
    %330 = vmatprep.subr.mxu0 0.0
    %331 = vmatpush1.msra.mxu0 0.0
    %332 = vmatprep.subr.mxu0 0.0
    %333 = vmatpush1.msra.mxu0 0.0
    %334 = vmatprep.subr.mxu0 0.0
    %335 = vmatpush1.msra.mxu0 0.0
    %336 = vmatprep.subr.mxu0 0.0
    %337 = vmatpush1.msra.mxu0 0.0
    %338 = vmatprep.subr.mxu0 0.0
    %339 = vmatpush1.msra.mxu0 0.0
    %340 = vmatprep.subr.mxu0 0.0
    %341 = vmatpush1.msra.mxu0 0.0
    %342 = vmatprep.subr.mxu0 0.0
    %343 = vmatpush1.msra.mxu0 0.0
    %344 = vmatprep.subr.mxu0 0.0
    %345 = vmatpush1.msra.mxu0 0.0
    %346 = vmatprep.mubr.f32.mxu0 0.0
    %347 = vmatmul.mubr.f32.gmra.mrb[0].mxu0 %v271
    %v348 = vpop.f32.mrb[0].mxu0
    %v349 = vadd.f32 0.0, %v348
    %v350 = vpop.f32.mrb[0].mxu0
    %351 = vmatprep.mubr.f32.mxu0 0.0
    %352 = vmatmul.mubr.f32.gmra.mrb[0].mxu0 %v274
    %v353 = vpop.f32.mrb[0].mxu0
    %v354 = vadd.f32 0.0, %v353
    %v355 = vpop.f32.mrb[0].mxu0
    %356 = vmatprep.mubr.f32.mxu0 0.0
    %357 = vmatmul.mubr.f32.gmra.mrb[0].mxu0 %v277
    %v358 = vpop.f32.mrb[0].mxu0
    %v359 = vadd.f32 0.0, %v358
    %v360 = vpop.f32.mrb[0].mxu0
    %361 = vmatprep.mubr.f32.mxu0 0.0
    %362 = vmatmul.mubr.f32.gmra.mrb[0].mxu0 %v280
    %v363 = vpop.f32.mrb[0].mxu0
    %v364 = vadd.f32 0.0, %v363
    %v365 = vpop.f32.mrb[0].mxu0
    %366 = vdwg.mxu0
    %v367 = vadd.f32 %v244, %v349
    %v368 = vadd.f32 %v249, %v354
    %v369 = vadd.f32 %v254, %v359
    %v370 = vadd.f32 %v259, %v364
    %v371 = vld [vmem:[%s6] sm:$0xff]
    %v372 = vld [vmem:[%s6 + $0x8] sm:$0xff]
    %v373 = vld [vmem:[%s6 + $0x10] sm:$0xff]
    %v374 = vld [vmem:[%s6 + $0x18] sm:$0xff]
    %376 = vset.pattern.permute.xlu0 0
    %377 = vperm.xlu0 %376, %v371
    %v378 = vpop.permute.xlu0 %377
    %381 = vset.pattern.permute.xlu0 0
    %382 = vperm.xlu0 %381, %v372
    %v383 = vpop.permute.xlu0 %382
    %386 = vset.pattern.permute.xlu0 0
    %387 = vperm.xlu0 %386, %v373
    %v388 = vpop.permute.xlu0 %387
    %391 = vset.pattern.permute.xlu0 0
    %392 = vperm.xlu0 %391, %v374
    %v393 = vpop.permute.xlu0 %392
    %v395 = vadd.f32 %v367, %v378
    %v396 = vadd.f32 %v368, %v383
    %v397 = vadd.f32 %v369, %v388
    %v398 = vadd.f32 %v370, %v393
    %v399 = vmax.f32 %v395, 0.0
    %v400 = vmax.f32 %v396, 0.0
    %v401 = vmax.f32 %v397, 0.0
    %v402 = vmax.f32 %v398, 0.0
    %v403 = vld [vmem:[%s7] sm:$0x1]
    %v404 = vld [vmem:[#allocation7] sm:$0x1]
    %406 = vset.pattern.permute.xlu0 0
    %407 = vperm.xlu0 %406, %v404
    %v408 = vpop.permute.xlu0 %407
    %v410 = vlaneseq
    %v411 = vshrl.u32 %v410, 7
    %v412 = vsub.s32 0, %v411
    %v413 = vrot.slane %v408, %v412
    %v415 = vsel %vm67, %v403, 0
    %417 = vmatprep.subr.mxu0 0.0
    %418 = vmatpush1.msra.mxu0 %v399
    %419 = vmatprep.subr.mxu0 0.0
    %420 = vmatpush1.msra.mxu0 %v400
    %421 = vmatprep.subr.mxu0 0.0
    %422 = vmatpush1.msra.mxu0 %v401
    %423 = vmatprep.subr.mxu0 0.0
    %424 = vmatpush1.msra.mxu0 %v402
    %425 = vmatprep.subr.mxu0 0.0
    %426 = vmatpush1.msra.mxu0 0.0
    %427 = vmatprep.subr.mxu0 0.0
    %428 = vmatpush1.msra.mxu0 0.0
    %429 = vmatprep.subr.mxu0 0.0
    %430 = vmatpush1.msra.mxu0 0.0
    %431 = vmatprep.subr.mxu0 0.0
    %432 = vmatpush1.msra.mxu0 0.0
    %433 = vmatprep.subr.mxu0 0.0
    %434 = vmatpush1.msra.mxu0 0.0
    %435 = vmatprep.subr.mxu0 0.0
    %436 = vmatpush1.msra.mxu0 0.0
    %437 = vmatprep.subr.mxu0 0.0
    %438 = vmatpush1.msra.mxu0 0.0
    %439 = vmatprep.subr.mxu0 0.0
    %440 = vmatpush1.msra.mxu0 0.0
    %441 = vmatprep.subr.mxu0 0.0
    %442 = vmatpush1.msra.mxu0 0.0
    %443 = vmatprep.subr.mxu0 0.0
    %444 = vmatpush1.msra.mxu0 0.0
    %445 = vmatprep.subr.mxu0 0.0
    %446 = vmatpush1.msra.mxu0 0.0
    %447 = vmatprep.subr.mxu0 0.0
    %448 = vmatpush1.msra.mxu0 0.0
    %449 = vmatprep.subr.mxu0 0.0
    %450 = vmatpush1.msra.mxu0 0.0
    %451 = vmatprep.subr.mxu0 0.0
    %452 = vmatpush1.msra.mxu0 0.0
    %453 = vmatprep.subr.mxu0 0.0
    %454 = vmatpush1.msra.mxu0 0.0
    %455 = vmatprep.subr.mxu0 0.0
    %456 = vmatpush1.msra.mxu0 0.0
    %457 = vmatprep.subr.mxu0 0.0
    %458 = vmatpush1.msra.mxu0 0.0
    %459 = vmatprep.subr.mxu0 0.0
    %460 = vmatpush1.msra.mxu0 0.0
    %461 = vmatprep.subr.mxu0 0.0
    %462 = vmatpush1.msra.mxu0 0.0
    %463 = vmatprep.subr.mxu0 0.0
    %464 = vmatpush1.msra.mxu0 0.0
    %465 = vmatprep.subr.mxu0 0.0
    %466 = vmatpush1.msra.mxu0 0.0
    %467 = vmatprep.subr.mxu0 0.0
    %468 = vmatpush1.msra.mxu0 0.0
    %469 = vmatprep.subr.mxu0 0.0
    %470 = vmatpush1.msra.mxu0 0.0
    %471 = vmatprep.subr.mxu0 0.0
    %472 = vmatpush1.msra.mxu0 0.0
    %473 = vmatprep.subr.mxu0 0.0
    %474 = vmatpush1.msra.mxu0 0.0
    %475 = vmatprep.subr.mxu0 0.0
    %476 = vmatpush1.msra.mxu0 0.0
    %477 = vmatprep.subr.mxu0 0.0
    %478 = vmatpush1.msra.mxu0 0.0
    %479 = vmatprep.subr.mxu0 0.0
    %480 = vmatpush1.msra.mxu0 0.0
    %481 = vmatprep.mubr.f32.mxu0 0.0
    %482 = vmatmul.mubr.f32.gmra.mrb[0].mxu0 %v415
    %v483 = vpop.f32.mrb[0].mxu0
    %v484 = vadd.f32 %v413, %v483
    %v485 = vpop.f32.mrb[0].mxu0
    %486 = vdwg.mxu0
    %v487 = vxor.u32 %v484, 2147483648
    %v488 = vmul.f32 %v487, 1.442695
    %v489 = vpow.pop %v488
    %v490 = vadd.f32 %v489, 1.0
    %v491 = vrcp.pop %v490
    %v492 = vmul.f32 1.0, %v491
    %s493 = smul.u32 0, 32
    %v494 = vlaneseq
    %v495 = vand.u32 %v494, 127
    %v496 = vstv %s493
    %v497 = vadd.s32 %v496, %v495
    %vm498 = vcmp.lt.s32.totalorder %v497, 32
    %v499 = vsel %vm498, %v492, 0.0
    %vm500 = vcmask 253952
    %501 = vst.msk [vmem:[#allocation8] sm:$0x1] %vm500, %v499
    %v502 = vmul.f32 %v499, %v499
    %v503 = vld [vmem:[#allocation2] sm:$0x1]
    %v504 = vsel %vm500, %v499, 0.0
    %505 = vadd.xlane.f32.xlu0 %v504
    %v506 = vpop.xlane.xlu0 %505
    %v507 = vadd.f32 %v503, %v506
    %vm508 = vcmask 0
    %509 = vst.msk [vmem:[#allocation2] sm:$0x1] %vm508, %v507
    %v510 = vld [vmem:[#allocation3] sm:$0x1]
    %v511 = vsel %vm500, %v502, 0.0
    %512 = vadd.xlane.f32.xlu0 %v511
    %v513 = vpop.xlane.xlu0 %512
    %v514 = vadd.f32 %v510, %v513
    %515 = vst.msk [vmem:[#allocation3] sm:$0x1] %vm508, %v514
    %v516 = vld [vmem:[#allocation4] sm:$0x1]
    %v517 = vmul.f32 %v502, %v499
    %v518 = vsel %vm500, %v517, 0.0
    %519 = vadd.xlane.f32.xlu0 %v518
    %v520 = vpop.xlane.xlu0 %519
    %v521 = vadd.f32 %v516, %v520
    %522 = vst.msk [vmem:[#allocation4] sm:$0x1] %vm508, %v521
    %v523 = vld [vmem:[#allocation5] sm:$0x1]
    %v524 = vmul.f32 %v502, %v502
    %v525 = vsel %vm500, %v524, 0.0
    %526 = vadd.xlane.f32.xlu0 %v525
    %v527 = vpop.xlane.xlu0 %526
    %v528 = vadd.f32 %v523, %v527
    %529 = vst.msk [vmem:[#allocation5] sm:$0x1] %vm508, %v528
    %v530 = vld [vmem:[%s9] sm:$0x1]
    %v531 = vlog2.pop %v492
    %v532 = vmul.f32 %v531, 0.6931472
    %v533 = vmax.f32 %v532, -100.0
    %v534 = vsub.f32 1.0, %v492
    %v535 = vlog2.pop %v534
    %v536 = vmul.f32 %v535, 0.6931472
    %v537 = vmax.f32 %v536, -100.0
    %v538 = vmul.f32 %v530, %v533
    %v539 = vsub.f32 1.0, %v530
    %v540 = vmul.f32 %v539, %v537
    %v541 = vadd.f32 %v538, %v540
    %v542 = vsub.f32 0.0, %v541
    %v543 = vld [vmem:[#allocation6] sm:$0x1]
    %v544 = vsel %vm498, %v542, 0.0
    %v545 = vsel %vm500, %v544, 0.0
    %546 = vadd.xlane.f32.xlu0 %v545
    %v547 = vpop.xlane.xlu0 %546
    %v548 = vadd.f32 %v543, %v547
    %549 = vst.msk [vmem:[#allocation6] sm:$0x1] %vm508, %v548
    // Predicated region
    $region46: #{gcn_edge_based_forward.7} parent=1 // pred_check
      %p550 = pneg %p41
    $region47: #{gcn_edge_based_forward.7} parent=1 // pred_check_branch
      %552 = sbr.rel (%p550) target = $region49
    $region48: #{gcn_edge_based_forward.7} parent=1 // pred_region
      %v553 = vld [vmem:[#allocation2] sm:$0x1]
      %v554 = vrcp.pop 32.0
      %v555 = vmul.f32 %v553, %v554
      %v556 = vmul.f32 %v555, %v555
      %v557 = vld [vmem:[#allocation5] sm:$0x1]
      %v558 = vmul.f32 %v557, %v554
      %v559 = vmul.f32 %v555, 4.0
      %v560 = vld [vmem:[#allocation4] sm:$0x1]
      %v561 = vmul.f32 %v560, %v554
      %v562 = vmul.f32 %v559, %v561
      %v563 = vsub.f32 %v558, %v562
      %v564 = vmul.f32 %v556, 6.0
      %v565 = vld [vmem:[#allocation3] sm:$0x1]
      %v566 = vmul.f32 %v565, %v554
      %v567 = vmul.f32 %v564, %v566
      %v568 = vadd.f32 %v563, %v567
      %v569 = vmul.f32 %v556, 3.0
      %v570 = vmul.f32 %v569, %v556
      %v571 = vsub.f32 %v568, %v570
      %v572 = vmax.f32 %v571, 0.0
      %v573 = vrsqrt.pop %v572
      %v574 = vmul.f32 %v572, %v573
      %vm575 = vcmp.eq.f32.partialorder %v572, inf
      %v576 = vsel %vm575, %v572, %v574
      %vm577 = vcmp.eq.f32.partialorder %v572, 0.0
      %v578 = vand.u32 %v572, 2147483648
      %v579 = vsel %vm577, %v578, %v576
      %v580 = vrsqrt.pop %v579
      %v581 = vmul.f32 %v579, %v580
      %vm582 = vcmp.eq.f32.partialorder %v579, inf
      %v583 = vsel %vm582, %v579, %v581
      %vm584 = vcmp.eq.f32.partialorder %v579, 0.0
      %v585 = vand.u32 %v579, 2147483648
      %v586 = vsel %vm584, %v585, %v583
      %v587 = vsub.f32 0.0, %v586
      %v588 = vld [vmem:[#allocation6] sm:$0x1]
      %v589 = vmul.f32 %v588, %v554
      %v590 = vmul.f32 %v587, 0.1
      %v591 = vadd.f32 %v589, %v590
      %592 = vst.msk [vmem:[#allocation10] sm:$0x1] %vm508, %v591
    $region49: #{gcn_edge_based_forward.7} parent=1 // pred_fallthru
      _
    // Predicated region
    $region50: #{gcn_edge_based_forward.7} parent=1 // pred_check
      _
    $region51: #{gcn_edge_based_forward.7} parent=1 // pred_check_branch
      %594 = sbr.rel (0) target = $region53
    $region52: #{gcn_edge_based_forward.7} parent=1 // pred_region
      %s596 = ssub.s32 16, 16
      %597 = vsyncadd [#allocation9], %s596
      %s599 = sshll.u32 [#allocation8], 4
      %s600 = int_to_ptr.vmem [resolvable:$true] %s599
      %602 = dma.vmem_to_hbm [thread:$0]  %s600, 16, %s10, [#allocation9]
    $region53: #{gcn_edge_based_forward.7} parent=1 // pred_fallthru
      _
    // Predicated region
    $region54: #{gcn_edge_based_forward.7} parent=1 // pred_check
      _
    $region55: #{gcn_edge_based_forward.7} parent=1 // pred_check_branch
      %604 = sbr.rel (0) target = $region57
    $region56: #{gcn_edge_based_forward.7} parent=1 // pred_region
      %s606 = ssub.s32 16, 16
      %607 = vsyncadd [#allocation11], %s606
      %s609 = sshll.u32 [#allocation10], 4
      %s610 = int_to_ptr.vmem [resolvable:$true] %s609
      %612 = dma.vmem_to_hbm [thread:$0]  %s610, 16, %s11, [#allocation11]
    $region57: #{gcn_edge_based_forward.7} parent=1 // pred_fallthru
      _
    // Predicated region
    $region58: #{gcn_edge_based_forward.7} parent=1 // pred_check
      _
    $region59: #{gcn_edge_based_forward.7} parent=1 // pred_check_branch
      %614 = sbr.rel (0) target = $region61
    $region60: #{gcn_edge_based_forward.7} parent=1 // pred_region
      %615 = dma.done [#allocation9], 16
    $region61: #{gcn_edge_based_forward.7} parent=1 // pred_fallthru
      _
    // Predicated region
    $region62: #{gcn_edge_based_forward.7} parent=1 // pred_check
      _
    $region63: #{gcn_edge_based_forward.7} parent=1 // pred_check_branch
      %617 = sbr.rel (0) target = $region65
    $region64: #{gcn_edge_based_forward.7} parent=1 // pred_region
      %618 = dma.done [#allocation11], 16
    $region65: #{gcn_edge_based_forward.7} parent=1 // pred_fallthru
      _
    %619 = vsyncpa [#allocation9], 1
    %620 = vsyncpa [#allocation11], 1

</llo_original>
